<compile_context>
chip_gen: v5e
topology: v5e:2x2
jax: 0.10.0
libtpu: 0.0.40
codegen_flags: <defaults>
</compile_context>

<pallas_src>
import jax
import jax.numpy as jnp
from jax.experimental import pallas as pl
from jax.experimental.pallas import tpu as pltpu


def _cdiv(a, b):
    return -(-a // b)


def _round_up(x, m):
    return ((x + m - 1) // m) * m


def _modulated_sine_kernel(x_ref, phi_ref, wl_ref, wm_ref, b_ref, o_ref):
    # x_ref:   (tr, fold*in_features)          native dtype (f32 or bf16)
    # phi_ref: (tr, fold*modulation_size)      native dtype
    # wl_ref:  (fold*in_features, fold*out)    compute dtype, block-diag, *omega_0
    # wm_ref:  (fold*mod_size,   fold*out)     compute dtype, block-diag, *omega_0
    # b_ref:   (1, fold*out)                   f32, omega_0*(b_lin+b_mod), tiled
    # o_ref:   (tr, fold*out)                  out dtype
    x = x_ref[...].astype(wl_ref.dtype)     # cast in VMEM, no extra HBM pass
    p = phi_ref[...].astype(wm_ref.dtype)
    z = (jnp.dot(x, wl_ref[...], preferred_element_type=jnp.float32)
         + jnp.dot(p, wm_ref[...], preferred_element_type=jnp.float32)
         + b_ref[...])
    # f32 elementwise path + sin: correct on v5e (no bf16 VALU).
    # TODO(synk): bundle-audit on v7x; if the sin polynomial saturates the
    # VALU there, switch the post-bias path to bf16 on v6e/v7x only.
    o_ref[...] = jnp.sin(z).astype(o_ref.dtype)


def modulated_sine_layer(x, phi, w_lin, b_lin, w_mod, b_mod, *,
                         omega_0=30.0,
                         compute_dtype=jnp.bfloat16,
                         out_dtype=None,
                         tile_rows=2048):
    """Pallas implementation of ModulatedSineLayer.forward.

    x:     [N, in_features]
    phi:   [N, modulation_size]
    w_lin: [in_features, out_features]      (torch linear.weight.T)
    b_lin: [out_features]
    w_mod: [modulation_size, out_features]  (torch modulation.weight.T)
    b_mod: [out_features]
    returns [N, out_features] in out_dtype (default: x.dtype)
    """
    N, in_features = x.shape
    mod_size = phi.shape[1]
    out_features = w_lin.shape[1]
    if out_dtype is None:
        out_dtype = x.dtype

    # ---- one-time parameter transforms (tiny arrays, done once) -----------
    wl = (omega_0 * w_lin.astype(jnp.float32)).astype(compute_dtype)
    wm = (omega_0 * w_mod.astype(jnp.float32)).astype(compute_dtype)
    bias = (omega_0 * (b_lin.astype(jnp.float32) + b_mod.astype(jnp.float32))
            ).reshape(1, out_features)

    # ---- lane-dense output via row folding (fold capped at 2) -------------
    if out_features < 128 and 128 % out_features == 0:
        fold = min(128 // out_features, 2)
    else:
        fold = 1
    if fold > 1:
        eye = jnp.eye(fold, dtype=compute_dtype)
        wl = jnp.kron(eye, wl)              # (fold*in,  fold*out) block-diag
        wm = jnp.kron(eye, wm)              # (fold*mod, fold*out) block-diag
        bias = jnp.tile(bias, (1, fold))    # (1, fold*out)
    fout = fold * out_features

    # ---- grid / tile selection ---------------------------------------------
    # Minimal padding (granularity 16 folded rows), tile count chosen so the
    # grid divides exactly, and step count forced even for v7x megacore.
    rows0 = _cdiv(N, fold)                          # folded rows (unpadded)
    tr_target = max(16, (_round_up(tile_rows, fold) // fold) // 16 * 16)
    if rows0 >= 512:                                # worth splitting across 2 TCs
        steps = max(2, _cdiv(rows0, tr_target))
        steps += steps % 2                          # even -> both v7x cores busy
    else:
        steps = 1
    tr = _round_up(_cdiv(rows0, steps), 16)         # folded rows per tile
    rows = steps * tr
    n_pad = rows * fold                             # padded original rows

    if n_pad != N:
        pad = n_pad - N
        x = jnp.pad(x, ((0, pad), (0, 0)))
        phi = jnp.pad(phi, ((0, pad), (0, 0)))

    # Row-major merge of `fold` consecutive rows: metadata-only reshape, no
    # dtype change, no extra HBM pass.
    xf = x.reshape(rows, fold * in_features)
    phif = phi.reshape(rows, fold * mod_size)

    out2 = pl.pallas_call(
        _modulated_sine_kernel,
        out_shape=jax.ShapeDtypeStruct((rows, fout), out_dtype),
        grid_spec=pltpu.PrefetchScalarGridSpec(
            num_scalar_prefetch=0,
            grid=(steps,),
            in_specs=[
                pl.BlockSpec((tr, fold * in_features), lambda i: (i, 0)),
                pl.BlockSpec((tr, fold * mod_size), lambda i: (i, 0)),
                pl.BlockSpec((fold * in_features, fout), lambda i: (0, 0)),
                pl.BlockSpec((fold * mod_size, fout), lambda i: (0, 0)),
                pl.BlockSpec((1, fout), lambda i: (0, 0)),
            ],
            out_specs=pl.BlockSpec((tr, fout), lambda i: (i, 0)),
        ),
        compiler_params=pltpu.CompilerParams(
            dimension_semantics=("parallel",)),
    )(xf, phif, wl, wm, bias)

    out = out2.reshape(n_pad, out_features)
    return out[:N] if n_pad != N else out


def _reference_quantized(x, phi, w_lin, b_lin, w_mod, b_mod, omega_0,
                         compute_dtype=jnp.bfloat16):
    """Mirrors the kernel arithmetic exactly (bf16 MXU, f32 accumulate/sin)."""
    wl = (omega_0 * w_lin).astype(compute_dtype)
    wm = (omega_0 * w_mod).astype(compute_dtype)
    b = (omega_0 * (b_lin + b_mod)).astype(jnp.float32)
    dn = (((1,), (0,)), ((), ()))
    z = (jax.lax.dot_general(x.astype(compute_dtype), wl, dn,
                             preferred_element_type=jnp.float32)
         + jax.lax.dot_general(phi.astype(compute_dtype), wm, dn,
                               preferred_element_type=jnp.float32)
         + b)
    return jnp.sin(z)


def _reference_f32(x, phi, w_lin, b_lin, w_mod, b_mod, omega_0):
    """True f32 ModulatedSineLayer.forward (HIGHEST precision matmuls)."""
    hi = jax.lax.Precision.HIGHEST
    z = (jnp.dot(x, w_lin, precision=hi) + b_lin
         + jnp.dot(phi, w_mod, precision=hi) + b_mod)
    return jnp.sin(omega_0 * z)


if __name__ == "__main__":
    # Module hyperparameters (small, consistent with ModulatedSineLayer).
    in_features = 32
    out_features = 64
    modulation_size = 256
    omega_0 = 30.0
    is_first = False
    N = 256  # number of input points (rows)

    key = jax.random.PRNGKey(0)
    k_x, k_phi, k_wl, k_bl, k_wm, k_bm = jax.random.split(key, 6)

    # Parameter init mirroring the torch module's __init__.
    if is_first:
        w_bound = 1.0 / in_features
    else:
        w_bound = (6.0 / in_features) ** 0.5 / omega_0
    w_lin = jax.random.uniform(k_wl, (in_features, out_features),
                               minval=-w_bound, maxval=w_bound,
                               dtype=jnp.float32)
    b_lin = jax.random.uniform(k_bl, (out_features,),
                               minval=-1.0 / in_features ** 0.5,
                               maxval=1.0 / in_features ** 0.5,
                               dtype=jnp.float32)
    w_mod = jax.random.uniform(k_wm, (modulation_size, out_features),
                               minval=-1.0 / modulation_size ** 0.5,
                               maxval=1.0 / modulation_size ** 0.5,
                               dtype=jnp.float32)
    b_mod = jax.random.uniform(k_bm, (out_features,),
                               minval=-1.0 / modulation_size ** 0.5,
                               maxval=1.0 / modulation_size ** 0.5,
                               dtype=jnp.float32)

    x = jax.random.normal(k_x, (N, in_features), dtype=jnp.float32)
    phi = jax.random.normal(k_phi, (N, modulation_size), dtype=jnp.float32)

    out = modulated_sine_layer(x, phi, w_lin, b_lin, w_mod, b_mod,
                               omega_0=omega_0)
    out = jax.block_until_ready(out)

    assert out.shape == (N, out_features)
    assert out.dtype == x.dtype

    # 1) Kernel-mechanics check: compare against a reference that mirrors the
    #    kernel's own bf16 quantization (validates folding / tiling / bias).
    ref_q = _reference_quantized(x, phi, w_lin, b_lin, w_mod, b_mod, omega_0)
    assert jnp.allclose(out, ref_q, atol=2e-3, rtol=0.0), \
        "mismatch vs quantized (kernel-arithmetic) reference"

    # 2) Accuracy bound vs the true f32 module forward.  omega_0=30 amplifies
    #    bf16 rounding of the modulation path; for these shapes the expected
    #    max |error| is ~0.1, so 0.3 is a comfortable documented bound.
    ref_f = _reference_f32(x, phi, w_lin, b_lin, w_mod, b_mod, omega_0)
    err = jnp.abs(out - ref_f)
    assert float(jnp.max(err)) < 0.3, "bf16 max error vs f32 reference too large"
    assert float(jnp.mean(err)) < 0.05, "bf16 mean error vs f32 reference too large"

    print("KERNEL_OK")
</pallas_src>

<mosaic_0001>
module attributes {stable_mosaic.version = 11 : i64} {
  func.func @_modulated_sine_kernel(%arg0: i32, %arg1: memref<128x64xf32, #tpu.memory_space<vmem>>, %arg2: memref<128x512xf32, #tpu.memory_space<vmem>>, %arg3: memref<64x128xbf16, #tpu.memory_space<vmem>>, %arg4: memref<512x128xbf16, #tpu.memory_space<vmem>>, %arg5: memref<1x128xf32, #tpu.memory_space<vmem>>, %arg6: memref<128x128xf32, #tpu.memory_space<vmem>>) attributes {dimension_semantics = [#tpu.dimension_semantics<parallel>], iteration_bounds = array<i64: 1>, scalar_prefetch = 0 : i64, scratch_operands = 0 : i64, tpu.core_type = #tpu.core_type<tc>, window_params = [{transform_indices = @transform_0, window_bounds = array<i64: 128, 64>}, {transform_indices = @transform_1, window_bounds = array<i64: 128, 512>}, {pipeline_mode = #tpu.pipeline_mode<synchronous>, transform_indices = @transform_2, window_bounds = array<i64: 64, 128>}, {pipeline_mode = #tpu.pipeline_mode<synchronous>, transform_indices = @transform_3, window_bounds = array<i64: 512, 128>}, {pipeline_mode = #tpu.pipeline_mode<synchronous>, transform_indices = @transform_4, window_bounds = array<i64: 1, 128>}, {transform_indices = @transform_5, window_bounds = array<i64: 128, 128>}]} {
    %c0 = arith.constant 0 : index
    %c0_0 = arith.constant 0 : index
    %0 = vector.load %arg1[%c0, %c0_0] : memref<128x64xf32, #tpu.memory_space<vmem>>, vector<128x64xf32>
    %1 = arith.truncf %0 : vector<128x64xf32> to vector<128x64xbf16>
    %c0_1 = arith.constant 0 : index
    %c0_2 = arith.constant 0 : index
    %2 = vector.load %arg2[%c0_1, %c0_2] : memref<128x512xf32, #tpu.memory_space<vmem>>, vector<128x512xf32>
    %3 = arith.truncf %2 : vector<128x512xf32> to vector<128x512xbf16>
    %c0_3 = arith.constant 0 : index
    %c0_4 = arith.constant 0 : index
    %4 = vector.load %arg3[%c0_3, %c0_4] : memref<64x128xbf16, #tpu.memory_space<vmem>>, vector<64x128xbf16>
    %cst = arith.constant dense<0.000000e+00> : vector<128x128xf32>
    %5 = tpu.matmul %1, %4, %cst {dimension_numbers = #tpu.dot_dimension_numbers<[1], [0], [0], [1], [0, 0, 1, 1], [], []>} : vector<128x64xbf16>, vector<64x128xbf16>, vector<128x128xf32> -> vector<128x128xf32>
    %c0_5 = arith.constant 0 : index
    %c0_6 = arith.constant 0 : index
    %6 = vector.load %arg4[%c0_5, %c0_6] : memref<512x128xbf16, #tpu.memory_space<vmem>>, vector<512x128xbf16>
    %cst_7 = arith.constant dense<0.000000e+00> : vector<128x128xf32>
    %7 = tpu.matmul %3, %6, %cst_7 {dimension_numbers = #tpu.dot_dimension_numbers<[1], [0], [0], [1], [0, 0, 1, 1], [], []>} : vector<128x512xbf16>, vector<512x128xbf16>, vector<128x128xf32> -> vector<128x128xf32>
    %8 = arith.addf %5, %7 : vector<128x128xf32>
    %c0_8 = arith.constant 0 : index
    %c0_9 = arith.constant 0 : index
    %9 = vector.load %arg5[%c0_8, %c0_9] : memref<1x128xf32, #tpu.memory_space<vmem>>, vector<1x128xf32>
    %10 = vector.broadcast %9 : vector<1x128xf32> to vector<128x128xf32>
    %11 = arith.addf %8, %10 : vector<128x128xf32>
    %12 = math.sin %11 : vector<128x128xf32>
    %c0_10 = arith.constant 0 : index
    %c0_11 = arith.constant 0 : index
    %13 = vector.load %arg6[%c0_10, %c0_11] : memref<128x128xf32, #tpu.memory_space<vmem>>, vector<128x128xf32>
    tpu.vector_store %arg6[%c0_10, %c0_11], %12 {strides = array<i32>} : memref<128x128xf32, #tpu.memory_space<vmem>>, vector<128x128xf32>,
    return
  }
  func.func @transform_0(%arg0: i32) -> (i32, i32) {
    %c0_i32 = arith.constant 0 : i32
    %c0_i32_0 = arith.constant 0 : i32
    return %arg0, %c0_i32 : i32, i32
  }
  func.func @transform_1(%arg0: i32) -> (i32, i32) {
    %c0_i32 = arith.constant 0 : i32
    %c0_i32_0 = arith.constant 0 : i32
    return %arg0, %c0_i32 : i32, i32
  }
  func.func @transform_2(%arg0: i32) -> (i32, i32) {
    %c0_i32 = arith.constant 0 : i32
    %c0_i32_0 = arith.constant 0 : i32
    %c0_i32_1 = arith.constant 0 : i32
    return %c0_i32, %c0_i32_0 : i32, i32
  }
  func.func @transform_3(%arg0: i32) -> (i32, i32) {
    %c0_i32 = arith.constant 0 : i32
    %c0_i32_0 = arith.constant 0 : i32
    %c0_i32_1 = arith.constant 0 : i32
    return %c0_i32, %c0_i32_0 : i32, i32
  }
  func.func @transform_4(%arg0: i32) -> (i32, i32) {
    %c0_i32 = arith.constant 0 : i32
    %c0_i32_0 = arith.constant 0 : i32
    %c0_i32_1 = arith.constant 0 : i32
    return %c0_i32, %c0_i32_0 : i32, i32
  }
  func.func @transform_5(%arg0: i32) -> (i32, i32) {
    %c0_i32 = arith.constant 0 : i32
    %c0_i32_0 = arith.constant 0 : i32
    return %arg0, %c0_i32 : i32, i32
  }
}

</mosaic_0001>

<llo_original>
// kernel: tpu_custom_call.1
$region0: #{tpu_custom_call.1}
  #allocation0 [shape = 'u32[]', space=smem, size = 0x4, offset = 0x4, fixed_abs, tag = 'smem constant byte address 0x4 - core index']
  #allocation1 [shape = 'u32[72,128]{1,0:T(1,128)}', space=vmem, size = 0x9000, scoped, tag = 'internal scratch']
  %s0 = inlined_call_operand.vmem [shape: f32[128,64], index: 0, kind: input, shape index: {}]
  %s1 = inlined_call_operand.hbm [shape: f32[128,512], index: 1, kind: input, shape index: {}]
  %s2 = inlined_call_operand.vmem [shape: bf16[64,128], index: 2, kind: input, shape index: {}]
  %s3 = inlined_call_operand.hbm [shape: bf16[512,128], index: 3, kind: input, shape index: {}]
  %s4 = inlined_call_operand.vmem [shape: f32[1,128], index: 4, kind: input, shape index: {}]
  %s5 = inlined_call_operand.hbm [shape: f32[128,128], index: 5, kind: output, shape index: {}]
  %s6 = sld [smem:[#allocation0]]
  $region38: #{tpu_custom_call.1} parent=0
    _
  %s8 = ssub.s32 1, %s6
  %s9 = scalar_select 0, %s8, %s6
  $region1: #{tpu_custom_call.1} parent=0
    #allocation2 [shape = 'u8[262144]{0}', space=vmem, size = 0x40000, scoped, tag = 'input window, operand 1, single buffered']
    #allocation3 [shape = 's32[1]{0}', space=sflag, size = 0x4, scoped, tag = 'scoped memory for tpu_custom_call.1']
    #allocation4 [shape = 's32[1]{0}', space=sflag, size = 0x4, scoped, tag = 'scoped memory for tpu_custom_call.1']
    #allocation5 [shape = 'u8[131072]{0}', space=vmem, size = 0x20000, scoped, tag = 'input window, operand 3, single buffered']
    #allocation6 [shape = 's32[1]{0}', space=sflag, size = 0x4, scoped, tag = 'scoped memory for tpu_custom_call.1']
    #allocation7 [shape = 'u8[65536]{0}', space=vmem, size = 0x10000, scoped, tag = 'output window, operand 0, single buffered']
    %10 = vsyncpa [#allocation3], 0
    %11 = vsyncpa [#allocation6], 0
    %12 = vsyncpa [#allocation4], 0
    // Predicated region
    $region2: #{tpu_custom_call.1} parent=1 // pred_check
      _
    $region3: #{tpu_custom_call.1} parent=1 // pred_check_branch
      %14 = sbr.rel (0) target = $region5
    $region4: #{tpu_custom_call.1} parent=1 // pred_region
      _
    $region5: #{tpu_custom_call.1} parent=1 // pred_fallthru
      _
    // Predicated region
    $region6: #{tpu_custom_call.1} parent=1 // pred_check
      _
    $region7: #{tpu_custom_call.1} parent=1 // pred_check_branch
      %16 = sbr.rel (0) target = $region9
    $region8: #{tpu_custom_call.1} parent=1 // pred_region
      %18 = vsyncadd [#allocation3], 0
      %s19 = sshll.u32 %s1, 4
      %s20 = int_to_ptr.hbm [resolvable:$true] %s19
      %s21 = sshll.u32 [#allocation2], 4
      %s22 = int_to_ptr.vmem [resolvable:$true] %s21
      %27 = dma.hbm_to_vmem [thread:$0]  %s20, 8192, %s22, [#allocation3], 512, 512, 32
    $region9: #{tpu_custom_call.1} parent=1 // pred_fallthru
      _
    // Predicated region
    $region10: #{tpu_custom_call.1} parent=1 // pred_check
      _
    $region11: #{tpu_custom_call.1} parent=1 // pred_check_branch
      %29 = sbr.rel (0) target = $region13
    $region12: #{tpu_custom_call.1} parent=1 // pred_region
      _
    $region13: #{tpu_custom_call.1} parent=1 // pred_fallthru
      _
    // Predicated region
    $region14: #{tpu_custom_call.1} parent=1 // pred_check
      _
    $region15: #{tpu_custom_call.1} parent=1 // pred_check_branch
      %31 = sbr.rel (0) target = $region17
    $region16: #{tpu_custom_call.1} parent=1 // pred_region
      %33 = vsyncadd [#allocation6], 0
      %s34 = sshll.u32 %s3, 4
      %s35 = int_to_ptr.hbm [resolvable:$true] %s34
      %s36 = sshll.u32 [#allocation5], 4
      %s37 = int_to_ptr.vmem [resolvable:$true] %s36
      %42 = dma.hbm_to_vmem [thread:$0]  %s35, 4096, %s37, [#allocation6], 64, 64, 4
    $region17: #{tpu_custom_call.1} parent=1 // pred_fallthru
      _
    // Predicated region
    $region18: #{tpu_custom_call.1} parent=1 // pred_check
      _
    $region19: #{tpu_custom_call.1} parent=1 // pred_check_branch
      %44 = sbr.rel (0) target = $region21
    $region20: #{tpu_custom_call.1} parent=1 // pred_region
      _
    $region21: #{tpu_custom_call.1} parent=1 // pred_fallthru
      _
    // Predicated region
    $region22: #{tpu_custom_call.1} parent=1 // pred_check
      _
    $region23: #{tpu_custom_call.1} parent=1 // pred_check_branch
      %46 = sbr.rel (0) target = $region25
    $region24: #{tpu_custom_call.1} parent=1 // pred_region
      %48 = dma.done [#allocation3], 8192
    $region25: #{tpu_custom_call.1} parent=1 // pred_fallthru
      _
    // Predicated region
    $region26: #{tpu_custom_call.1} parent=1 // pred_check
      _
    $region27: #{tpu_custom_call.1} parent=1 // pred_check_branch
      %50 = sbr.rel (0) target = $region29
    $region28: #{tpu_custom_call.1} parent=1 // pred_region
      %52 = dma.done [#allocation6], 4096
    $region29: #{tpu_custom_call.1} parent=1 // pred_fallthru
      _
    %v54 = vld [vmem:[%s0] sm:$0xff]
    %v55 = vld [vmem:[%s0 + $0x8] sm:$0xff]
    %v56 = vld [vmem:[%s0 + $0x10] sm:$0xff]
    %v57 = vld [vmem:[%s0 + $0x18] sm:$0xff]
    %v58 = vld [vmem:[%s0 + $0x20] sm:$0xff]
    %v59 = vld [vmem:[%s0 + $0x28] sm:$0xff]
    %v60 = vld [vmem:[%s0 + $0x30] sm:$0xff]
    %v61 = vld [vmem:[%s0 + $0x38] sm:$0xff]
    %v62 = vld [vmem:[%s0 + $0x40] sm:$0xff]
    %v63 = vld [vmem:[%s0 + $0x48] sm:$0xff]
    %v64 = vld [vmem:[%s0 + $0x50] sm:$0xff]
    %v65 = vld [vmem:[%s0 + $0x58] sm:$0xff]
    %v66 = vld [vmem:[%s0 + $0x60] sm:$0xff]
    %v67 = vld [vmem:[%s0 + $0x68] sm:$0xff]
    %v68 = vld [vmem:[%s0 + $0x70] sm:$0xff]
    %v69 = vld [vmem:[%s0 + $0x78] sm:$0xff]
    %v70 = vpack.c.bf16 %v55, %v54
    %v71 = vpack.c.bf16 %v57, %v56
    %v72 = vpack.c.bf16 %v59, %v58
    %v73 = vpack.c.bf16 %v61, %v60
    %v74 = vpack.c.bf16 %v63, %v62
    %v75 = vpack.c.bf16 %v65, %v64
    %v76 = vpack.c.bf16 %v67, %v66
    %v77 = vpack.c.bf16 %v69, %v68
    %v78 = vld [vmem:[#allocation2] sm:$0xff]
    %v79 = vld [vmem:[#allocation2 + $0x8] sm:$0xff]
    %v80 = vld [vmem:[#allocation2 + $0x10] sm:$0xff]
    %v81 = vld [vmem:[#allocation2 + $0x18] sm:$0xff]
    %v82 = vld [vmem:[#allocation2 + $0x20] sm:$0xff]
    %v83 = vld [vmem:[#allocation2 + $0x28] sm:$0xff]
    %v84 = vld [vmem:[#allocation2 + $0x30] sm:$0xff]
    %v85 = vld [vmem:[#allocation2 + $0x38] sm:$0xff]
    %v86 = vld [vmem:[#allocation2 + $0x40] sm:$0xff]
    %v87 = vld [vmem:[#allocation2 + $0x48] sm:$0xff]
    %v88 = vld [vmem:[#allocation2 + $0x50] sm:$0xff]
    %v89 = vld [vmem:[#allocation2 + $0x58] sm:$0xff]
    %v90 = vld [vmem:[#allocation2 + $0x60] sm:$0xff]
    %v91 = vld [vmem:[#allocation2 + $0x68] sm:$0xff]
    %v92 = vld [vmem:[#allocation2 + $0x70] sm:$0xff]
    %v93 = vld [vmem:[#allocation2 + $0x78] sm:$0xff]
    %v94 = vld [vmem:[#allocation2 + $0x80] sm:$0xff]
    %v95 = vld [vmem:[#allocation2 + $0x88] sm:$0xff]
    %v96 = vld [vmem:[#allocation2 + $0x90] sm:$0xff]
    %v97 = vld [vmem:[#allocation2 + $0x98] sm:$0xff]
    %v98 = vld [vmem:[#allocation2 + $0xa0] sm:$0xff]
    %v99 = vld [vmem:[#allocation2 + $0xa8] sm:$0xff]
    %v100 = vld [vmem:[#allocation2 + $0xb0] sm:$0xff]
    %v101 = vld [vmem:[#allocation2 + $0xb8] sm:$0xff]
    %v102 = vld [vmem:[#allocation2 + $0xc0] sm:$0xff]
    %v103 = vld [vmem:[#allocation2 + $0xc8] sm:$0xff]
    %v104 = vld [vmem:[#allocation2 + $0xd0] sm:$0xff]
    %v105 = vld [vmem:[#allocation2 + $0xd8] sm:$0xff]
    %v106 = vld [vmem:[#allocation2 + $0xe0] sm:$0xff]
    %v107 = vld [vmem:[#allocation2 + $0xe8] sm:$0xff]
    %v108 = vld [vmem:[#allocation2 + $0xf0] sm:$0xff]
    %v109 = vld [vmem:[#allocation2 + $0xf8] sm:$0xff]
    %v110 = vld [vmem:[#allocation2 + $0x100] sm:$0xff]
    %v111 = vld [vmem:[#allocation2 + $0x108] sm:$0xff]
    %v112 = vld [vmem:[#allocation2 + $0x110] sm:$0xff]
    %v113 = vld [vmem:[#allocation2 + $0x118] sm:$0xff]
    %v114 = vld [vmem:[#allocation2 + $0x120] sm:$0xff]
    %v115 = vld [vmem:[#allocation2 + $0x128] sm:$0xff]
    %v116 = vld [vmem:[#allocation2 + $0x130] sm:$0xff]
    %v117 = vld [vmem:[#allocation2 + $0x138] sm:$0xff]
    %v118 = vld [vmem:[#allocation2 + $0x140] sm:$0xff]
    %v119 = vld [vmem:[#allocation2 + $0x148] sm:$0xff]
    %v120 = vld [vmem:[#allocation2 + $0x150] sm:$0xff]
    %v121 = vld [vmem:[#allocation2 + $0x158] sm:$0xff]
    %v122 = vld [vmem:[#allocation2 + $0x160] sm:$0xff]
    %v123 = vld [vmem:[#allocation2 + $0x168] sm:$0xff]
    %v124 = vld [vmem:[#allocation2 + $0x170] sm:$0xff]
    %v125 = vld [vmem:[#allocation2 + $0x178] sm:$0xff]
    %v126 = vld [vmem:[#allocation2 + $0x180] sm:$0xff]
    %v127 = vld [vmem:[#allocation2 + $0x188] sm:$0xff]
    %v128 = vld [vmem:[#allocation2 + $0x190] sm:$0xff]
    %v129 = vld [vmem:[#allocation2 + $0x198] sm:$0xff]
    %v130 = vld [vmem:[#allocation2 + $0x1a0] sm:$0xff]
    %v131 = vld [vmem:[#allocation2 + $0x1a8] sm:$0xff]
    %v132 = vld [vmem:[#allocation2 + $0x1b0] sm:$0xff]
    %v133 = vld [vmem:[#allocation2 + $0x1b8] sm:$0xff]
    %v134 = vld [vmem:[#allocation2 + $0x1c0] sm:$0xff]
    %v135 = vld [vmem:[#allocation2 + $0x1c8] sm:$0xff]
    %v136 = vld [vmem:[#allocation2 + $0x1d0] sm:$0xff]
    %v137 = vld [vmem:[#allocation2 + $0x1d8] sm:$0xff]
    %v138 = vld [vmem:[#allocation2 + $0x1e0] sm:$0xff]
    %v139 = vld [vmem:[#allocation2 + $0x1e8] sm:$0xff]
    %v140 = vld [vmem:[#allocation2 + $0x1f0] sm:$0xff]
    %v141 = vld [vmem:[#allocation2 + $0x1f8] sm:$0xff]
    %v142 = vpack.c.bf16 %v82, %v78
    %v143 = vpack.c.bf16 %v83, %v79
    %v144 = vpack.c.bf16 %v84, %v80
    %v145 = vpack.c.bf16 %v85, %v81
    %v146 = vpack.c.bf16 %v90, %v86
    %v147 = vpack.c.bf16 %v91, %v87
    %v148 = vpack.c.bf16 %v92, %v88
    %v149 = vpack.c.bf16 %v93, %v89
    %v150 = vpack.c.bf16 %v98, %v94
    %v151 = vpack.c.bf16 %v99, %v95
    %v152 = vpack.c.bf16 %v100, %v96
    %v153 = vpack.c.bf16 %v101, %v97
    %v154 = vpack.c.bf16 %v106, %v102
    %v155 = vpack.c.bf16 %v107, %v103
    %v156 = vpack.c.bf16 %v108, %v104
    %v157 = vpack.c.bf16 %v109, %v105
    %v158 = vpack.c.bf16 %v114, %v110
    %v159 = vpack.c.bf16 %v115, %v111
    %v160 = vpack.c.bf16 %v116, %v112
    %v161 = vpack.c.bf16 %v117, %v113
    %v162 = vpack.c.bf16 %v122, %v118
    %v163 = vpack.c.bf16 %v123, %v119
    %v164 = vpack.c.bf16 %v124, %v120
    %v165 = vpack.c.bf16 %v125, %v121
    %v166 = vpack.c.bf16 %v130, %v126
    %v167 = vpack.c.bf16 %v131, %v127
    %v168 = vpack.c.bf16 %v132, %v128
    %v169 = vpack.c.bf16 %v133, %v129
    %v170 = vpack.c.bf16 %v138, %v134
    %v171 = vpack.c.bf16 %v139, %v135
    %v172 = vpack.c.bf16 %v140, %v136
    %v173 = vpack.c.bf16 %v141, %v137
    %v174 = vld [vmem:[%s2] sm:$0xf]
    %v175 = vld [vmem:[%s2 + $0x4] sm:$0xf]
    %v176 = vld [vmem:[%s2 + $0x8] sm:$0xf]
    %v177 = vld [vmem:[%s2 + $0xc] sm:$0xf]
    %v178 = vld [vmem:[%s2 + $0x10] sm:$0xf]
    %v179 = vld [vmem:[%s2 + $0x14] sm:$0xf]
    %v180 = vld [vmem:[%s2 + $0x18] sm:$0xf]
    %v181 = vld [vmem:[%s2 + $0x1c] sm:$0xf]
    %v182 = vld [vmem:[#allocation5] sm:$0xf]
    %v183 = vld [vmem:[#allocation5 + $0x4] sm:$0xf]
    %v184 = vld [vmem:[#allocation5 + $0x8] sm:$0xf]
    %v185 = vld [vmem:[#allocation5 + $0xc] sm:$0xf]
    %v186 = vld [vmem:[#allocation5 + $0x10] sm:$0xf]
    %v187 = vld [vmem:[#allocation5 + $0x14] sm:$0xf]
    %v188 = vld [vmem:[#allocation5 + $0x18] sm:$0xf]
    %v189 = vld [vmem:[#allocation5 + $0x1c] sm:$0xf]
    %v190 = vld [vmem:[#allocation5 + $0x20] sm:$0xf]
    %v191 = vld [vmem:[#allocation5 + $0x24] sm:$0xf]
    %v192 = vld [vmem:[#allocation5 + $0x28] sm:$0xf]
    %v193 = vld [vmem:[#allocation5 + $0x2c] sm:$0xf]
    %v194 = vld [vmem:[#allocation5 + $0x30] sm:$0xf]
    %v195 = vld [vmem:[#allocation5 + $0x34] sm:$0xf]
    %v196 = vld [vmem:[#allocation5 + $0x38] sm:$0xf]
    %v197 = vld [vmem:[#allocation5 + $0x3c] sm:$0xf]
    %v198 = vld [vmem:[#allocation5 + $0x40] sm:$0xf]
    %v199 = vld [vmem:[#allocation5 + $0x44] sm:$0xf]
    %v200 = vld [vmem:[#allocation5 + $0x48] sm:$0xf]
    %v201 = vld [vmem:[#allocation5 + $0x4c] sm:$0xf]
    %v202 = vld [vmem:[#allocation5 + $0x50] sm:$0xf]
    %v203 = vld [vmem:[#allocation5 + $0x54] sm:$0xf]
    %v204 = vld [vmem:[#allocation5 + $0x58] sm:$0xf]
    %v205 = vld [vmem:[#allocation5 + $0x5c] sm:$0xf]
    %v206 = vld [vmem:[#allocation5 + $0x60] sm:$0xf]
    %v207 = vld [vmem:[#allocation5 + $0x64] sm:$0xf]
    %v208 = vld [vmem:[#allocation5 + $0x68] sm:$0xf]
    %v209 = vld [vmem:[#allocation5 + $0x6c] sm:$0xf]
    %v210 = vld [vmem:[#allocation5 + $0x70] sm:$0xf]
    %v211 = vld [vmem:[#allocation5 + $0x74] sm:$0xf]
    %v212 = vld [vmem:[#allocation5 + $0x78] sm:$0xf]
    %v213 = vld [vmem:[#allocation5 + $0x7c] sm:$0xf]
    %v214 = vld [vmem:[#allocation5 + $0x80] sm:$0xf]
    %v215 = vld [vmem:[#allocation5 + $0x84] sm:$0xf]
    %v216 = vld [vmem:[#allocation5 + $0x88] sm:$0xf]
    %v217 = vld [vmem:[#allocation5 + $0x8c] sm:$0xf]
    %v218 = vld [vmem:[#allocation5 + $0x90] sm:$0xf]
    %v219 = vld [vmem:[#allocation5 + $0x94] sm:$0xf]
    %v220 = vld [vmem:[#allocation5 + $0x98] sm:$0xf]
    %v221 = vld [vmem:[#allocation5 + $0x9c] sm:$0xf]
    %v222 = vld [vmem:[#allocation5 + $0xa0] sm:$0xf]
    %v223 = vld [vmem:[#allocation5 + $0xa4] sm:$0xf]
    %v224 = vld [vmem:[#allocation5 + $0xa8] sm:$0xf]
    %v225 = vld [vmem:[#allocation5 + $0xac] sm:$0xf]
    %v226 = vld [vmem:[#allocation5 + $0xb0] sm:$0xf]
    %v227 = vld [vmem:[#allocation5 + $0xb4] sm:$0xf]
    %v228 = vld [vmem:[#allocation5 + $0xb8] sm:$0xf]
    %v229 = vld [vmem:[#allocation5 + $0xbc] sm:$0xf]
    %v230 = vld [vmem:[#allocation5 + $0xc0] sm:$0xf]
    %v231 = vld [vmem:[#allocation5 + $0xc4] sm:$0xf]
    %v232 = vld [vmem:[#allocation5 + $0xc8] sm:$0xf]
    %v233 = vld [vmem:[#allocation5 + $0xcc] sm:$0xf]
    %v234 = vld [vmem:[#allocation5 + $0xd0] sm:$0xf]
    %v235 = vld [vmem:[#allocation5 + $0xd4] sm:$0xf]
    %v236 = vld [vmem:[#allocation5 + $0xd8] sm:$0xf]
    %v237 = vld [vmem:[#allocation5 + $0xdc] sm:$0xf]
    %v238 = vld [vmem:[#allocation5 + $0xe0] sm:$0xf]
    %v239 = vld [vmem:[#allocation5 + $0xe4] sm:$0xf]
    %v240 = vld [vmem:[#allocation5 + $0xe8] sm:$0xf]
    %v241 = vld [vmem:[#allocation5 + $0xec] sm:$0xf]
    %v242 = vld [vmem:[#allocation5 + $0xf0] sm:$0xf]
    %v243 = vld [vmem:[#allocation5 + $0xf4] sm:$0xf]
    %v244 = vld [vmem:[#allocation5 + $0xf8] sm:$0xf]
    %v245 = vld [vmem:[#allocation5 + $0xfc] sm:$0xf]
    %v310 = vunpack.c.l.b16 %v182
    %v311 = vunpack.c.l.b16 %v183
    %v312 = vunpack.c.l.b16 %v184
    %v313 = vunpack.c.l.b16 %v185
    %v314 = vunpack.c.l.b16 %v186
    %v315 = vunpack.c.l.b16 %v187
    %v316 = vunpack.c.l.b16 %v188
    %v317 = vunpack.c.l.b16 %v189
    %v318 = vunpack.c.l.b16 %v190
    %v319 = vunpack.c.l.b16 %v191
    %v320 = vunpack.c.l.b16 %v192
    %v321 = vunpack.c.l.b16 %v193
    %v322 = vunpack.c.l.b16 %v194
    %v323 = vunpack.c.l.b16 %v195
    %v324 = vunpack.c.l.b16 %v196
    %v325 = vunpack.c.l.b16 %v197
    %v326 = vunpack.c.l.b16 %v198
    %v327 = vunpack.c.l.b16 %v199
    %v328 = vunpack.c.l.b16 %v200
    %v329 = vunpack.c.l.b16 %v201
    %v330 = vunpack.c.l.b16 %v202
    %v331 = vunpack.c.l.b16 %v203
    %v332 = vunpack.c.l.b16 %v204
    %v333 = vunpack.c.l.b16 %v205
    %v334 = vunpack.c.l.b16 %v206
    %v335 = vunpack.c.l.b16 %v207
    %v336 = vunpack.c.l.b16 %v208
    %v337 = vunpack.c.l.b16 %v209
    %v338 = vunpack.c.l.b16 %v210
    %v339 = vunpack.c.l.b16 %v211
    %v340 = vunpack.c.l.b16 %v212
    %v341 = vunpack.c.l.b16 %v213
    %v342 = vunpack.c.l.b16 %v214
    %v343 = vunpack.c.l.b16 %v215
    %v344 = vunpack.c.l.b16 %v216
    %v345 = vunpack.c.l.b16 %v217
    %v346 = vunpack.c.l.b16 %v218
    %v347 = vunpack.c.l.b16 %v219
    %v348 = vunpack.c.l.b16 %v220
    %v349 = vunpack.c.l.b16 %v221
    %v350 = vunpack.c.l.b16 %v222
    %v351 = vunpack.c.l.b16 %v223
    %v352 = vunpack.c.l.b16 %v224
    %v353 = vunpack.c.l.b16 %v225
    %v354 = vunpack.c.l.b16 %v226
    %v355 = vunpack.c.l.b16 %v227
    %v356 = vunpack.c.l.b16 %v228
    %v357 = vunpack.c.l.b16 %v229
    %v358 = vunpack.c.l.b16 %v230
    %v359 = vunpack.c.l.b16 %v231
    %v360 = vunpack.c.l.b16 %v232
    %v361 = vunpack.c.l.b16 %v233
    %v362 = vunpack.c.l.b16 %v234
    %v363 = vunpack.c.l.b16 %v235
    %v364 = vunpack.c.l.b16 %v236
    %v365 = vunpack.c.l.b16 %v237
    %v366 = vunpack.c.l.b16 %v238
    %v367 = vunpack.c.l.b16 %v239
    %v368 = vunpack.c.l.b16 %v240
    %v369 = vunpack.c.l.b16 %v241
    %v370 = vunpack.c.l.b16 %v242
    %v371 = vunpack.c.l.b16 %v243
    %v372 = vunpack.c.l.b16 %v244
    %v373 = vunpack.c.l.b16 %v245
    %v374 = vpack.c.b16 %v311, %v310
    %v375 = vpack.c.b16 %v313, %v312
    %v376 = vpack.c.b16 %v315, %v314
    %v377 = vpack.c.b16 %v317, %v316
    %v378 = vpack.c.b16 %v319, %v318
    %v379 = vpack.c.b16 %v321, %v320
    %v380 = vpack.c.b16 %v323, %v322
    %v381 = vpack.c.b16 %v325, %v324
    %v382 = vpack.c.b16 %v327, %v326
    %v383 = vpack.c.b16 %v329, %v328
    %v384 = vpack.c.b16 %v331, %v330
    %v385 = vpack.c.b16 %v333, %v332
    %v386 = vpack.c.b16 %v335, %v334
    %v387 = vpack.c.b16 %v337, %v336
    %v388 = vpack.c.b16 %v339, %v338
    %v389 = vpack.c.b16 %v341, %v340
    %v390 = vpack.c.b16 %v343, %v342
    %v391 = vpack.c.b16 %v345, %v344
    %v392 = vpack.c.b16 %v347, %v346
    %v393 = vpack.c.b16 %v349, %v348
    %v394 = vpack.c.b16 %v351, %v350
    %v395 = vpack.c.b16 %v353, %v352
    %v396 = vpack.c.b16 %v355, %v354
    %v397 = vpack.c.b16 %v357, %v356
    %v398 = vpack.c.b16 %v359, %v358
    %v399 = vpack.c.b16 %v361, %v360
    %v400 = vpack.c.b16 %v363, %v362
    %v401 = vpack.c.b16 %v365, %v364
    %v402 = vpack.c.b16 %v367, %v366
    %v403 = vpack.c.b16 %v369, %v368
    %v404 = vpack.c.b16 %v371, %v370
    %v405 = vpack.c.b16 %v373, %v372
    %438 = vmatpush.bf16.msra.mxu0 %v381
    %439 = vmatpush.bf16.msra.mxu0 %v380
    %440 = vmatpush.bf16.msra.mxu0 %v379
    %441 = vmatpush.bf16.msra.mxu0 %v378
    %442 = vmatpush.bf16.msra.mxu0 %v377
    %443 = vmatpush.bf16.msra.mxu0 %v376
    %444 = vmatpush.bf16.msra.mxu0 %v375
    %445 = vmatpush.bf16.msra.mxu0 %v374
    %446 = vmatmul.bf16.gmra.mxu0 %v142
    %v447 = vpop.f32.mrf.mxu0
    %v448 = vadd.f32 0.0, %v447
    %v449 = vpop.f32.mrf.mxu0
    %v450 = vadd.f32 0.0, %v449
    %451 = vmatmul.bf16.gmra.mxu0 %v146
    %v452 = vpop.f32.mrf.mxu0
    %v453 = vadd.f32 0.0, %v452
    %v454 = vpop.f32.mrf.mxu0
    %v455 = vadd.f32 0.0, %v454
    %456 = vmatmul.bf16.gmra.mxu0 %v150
    %v457 = vpop.f32.mrf.mxu0
    %v458 = vadd.f32 0.0, %v457
    %v459 = vpop.f32.mrf.mxu0
    %v460 = vadd.f32 0.0, %v459
    %461 = vmatmul.bf16.gmra.mxu0 %v154
    %v462 = vpop.f32.mrf.mxu0
    %v463 = vadd.f32 0.0, %v462
    %v464 = vpop.f32.mrf.mxu0
    %v465 = vadd.f32 0.0, %v464
    %466 = vmatmul.bf16.gmra.mxu0 %v158
    %v467 = vpop.f32.mrf.mxu0
    %v468 = vadd.f32 0.0, %v467
    %v469 = vpop.f32.mrf.mxu0
    %v470 = vadd.f32 0.0, %v469
    %471 = vmatmul.bf16.gmra.mxu0 %v162
    %v472 = vpop.f32.mrf.mxu0
    %v473 = vadd.f32 0.0, %v472
    %v474 = vpop.f32.mrf.mxu0
    %v475 = vadd.f32 0.0, %v474
    %476 = vmatmul.bf16.gmra.mxu0 %v166
    %v477 = vpop.f32.mrf.mxu0
    %v478 = vadd.f32 0.0, %v477
    %v479 = vpop.f32.mrf.mxu0
    %v480 = vadd.f32 0.0, %v479
    %481 = vmatmul.bf16.gmra.mxu0 %v170
    %v482 = vpop.f32.mrf.mxu0
    %v483 = vadd.f32 0.0, %v482
    %v484 = vpop.f32.mrf.mxu0
    %v485 = vadd.f32 0.0, %v484
    %486 = vdwg.mxu0
    %487 = vmatpush.bf16.msra.mxu0 %v389
    %488 = vmatpush.bf16.msra.mxu0 %v388
    %489 = vmatpush.bf16.msra.mxu0 %v387
    %490 = vmatpush.bf16.msra.mxu0 %v386
    %491 = vmatpush.bf16.msra.mxu0 %v385
    %492 = vmatpush.bf16.msra.mxu0 %v384
    %493 = vmatpush.bf16.msra.mxu0 %v383
    %494 = vmatpush.bf16.msra.mxu0 %v382
    %495 = vmatmul.bf16.gmra.mxu0 %v143
    %v496 = vpop.f32.mrf.mxu0
    %v497 = vadd.f32 %v448, %v496
    %v498 = vpop.f32.mrf.mxu0
    %v499 = vadd.f32 %v450, %v498
    %500 = vmatmul.bf16.gmra.mxu0 %v147
    %v501 = vpop.f32.mrf.mxu0
    %v502 = vadd.f32 %v453, %v501
    %v503 = vpop.f32.mrf.mxu0
    %v504 = vadd.f32 %v455, %v503
    %505 = vmatmul.bf16.gmra.mxu0 %v151
    %v506 = vpop.f32.mrf.mxu0
    %v507 = vadd.f32 %v458, %v506
    %v508 = vpop.f32.mrf.mxu0
    %v509 = vadd.f32 %v460, %v508
    %510 = vmatmul.bf16.gmra.mxu0 %v155
    %v511 = vpop.f32.mrf.mxu0
    %v512 = vadd.f32 %v463, %v511
    %v513 = vpop.f32.mrf.mxu0
    %v514 = vadd.f32 %v465, %v513
    %515 = vmatmul.bf16.gmra.mxu0 %v159
    %v516 = vpop.f32.mrf.mxu0
    %v517 = vadd.f32 %v468, %v516
    %v518 = vpop.f32.mrf.mxu0
    %v519 = vadd.f32 %v470, %v518
    %520 = vmatmul.bf16.gmra.mxu0 %v163
    %v521 = vpop.f32.mrf.mxu0
    %v522 = vadd.f32 %v473, %v521
    %v523 = vpop.f32.mrf.mxu0
    %v524 = vadd.f32 %v475, %v523
    %525 = vmatmul.bf16.gmra.mxu0 %v167
    %v526 = vpop.f32.mrf.mxu0
    %v527 = vadd.f32 %v478, %v526
    %v528 = vpop.f32.mrf.mxu0
    %v529 = vadd.f32 %v480, %v528
    %530 = vmatmul.bf16.gmra.mxu0 %v171
    %v531 = vpop.f32.mrf.mxu0
    %v532 = vadd.f32 %v483, %v531
    %v533 = vpop.f32.mrf.mxu0
    %v534 = vadd.f32 %v485, %v533
    %535 = vdwg.mxu0
    %536 = vmatpush.bf16.msra.mxu0 %v397
    %537 = vmatpush.bf16.msra.mxu0 %v396
    %538 = vmatpush.bf16.msra.mxu0 %v395
    %539 = vmatpush.bf16.msra.mxu0 %v394
    %540 = vmatpush.bf16.msra.mxu0 %v393
    %541 = vmatpush.bf16.msra.mxu0 %v392
    %542 = vmatpush.bf16.msra.mxu0 %v391
    %543 = vmatpush.bf16.msra.mxu0 %v390
    %544 = vmatmul.bf16.gmra.mxu0 %v144
    %v545 = vpop.f32.mrf.mxu0
    %v546 = vadd.f32 %v497, %v545
    %v547 = vpop.f32.mrf.mxu0
    %v548 = vadd.f32 %v499, %v547
    %549 = vmatmul.bf16.gmra.mxu0 %v148
    %v550 = vpop.f32.mrf.mxu0
    %v551 = vadd.f32 %v502, %v550
    %v552 = vpop.f32.mrf.mxu0
    %v553 = vadd.f32 %v504, %v552
    %554 = vmatmul.bf16.gmra.mxu0 %v152
    %v555 = vpop.f32.mrf.mxu0
    %v556 = vadd.f32 %v507, %v555
    %v557 = vpop.f32.mrf.mxu0
    %v558 = vadd.f32 %v509, %v557
    %559 = vmatmul.bf16.gmra.mxu0 %v156
    %v560 = vpop.f32.mrf.mxu0
    %v561 = vadd.f32 %v512, %v560
    %v562 = vpop.f32.mrf.mxu0
    %v563 = vadd.f32 %v514, %v562
    %564 = vmatmul.bf16.gmra.mxu0 %v160
    %v565 = vpop.f32.mrf.mxu0
    %v566 = vadd.f32 %v517, %v565
    %v567 = vpop.f32.mrf.mxu0
    %v568 = vadd.f32 %v519, %v567
    %569 = vmatmul.bf16.gmra.mxu0 %v164
    %v570 = vpop.f32.mrf.mxu0
    %v571 = vadd.f32 %v522, %v570
    %v572 = vpop.f32.mrf.mxu0
    %v573 = vadd.f32 %v524, %v572
    %574 = vmatmul.bf16.gmra.mxu0 %v168
    %v575 = vpop.f32.mrf.mxu0
    %v576 = vadd.f32 %v527, %v575
    %v577 = vpop.f32.mrf.mxu0
    %v578 = vadd.f32 %v529, %v577
    %579 = vmatmul.bf16.gmra.mxu0 %v172
    %v580 = vpop.f32.mrf.mxu0
    %v581 = vadd.f32 %v532, %v580
    %v582 = vpop.f32.mrf.mxu0
    %v583 = vadd.f32 %v534, %v582
    %584 = vdwg.mxu0
    %585 = vmatpush.bf16.msra.mxu0 %v405
    %586 = vmatpush.bf16.msra.mxu0 %v404
    %587 = vmatpush.bf16.msra.mxu0 %v403
    %588 = vmatpush.bf16.msra.mxu0 %v402
    %589 = vmatpush.bf16.msra.mxu0 %v401
    %590 = vmatpush.bf16.msra.mxu0 %v400
    %591 = vmatpush.bf16.msra.mxu0 %v399
    %592 = vmatpush.bf16.msra.mxu0 %v398
    %593 = vmatmul.bf16.gmra.mxu0 %v145
    %v594 = vpop.f32.mrf.mxu0
    %v595 = vadd.f32 %v546, %v594
    %v596 = vpop.f32.mrf.mxu0
    %v597 = vadd.f32 %v548, %v596
    %598 = vmatmul.bf16.gmra.mxu0 %v149
    %v599 = vpop.f32.mrf.mxu0
    %v600 = vadd.f32 %v551, %v599
    %v601 = vpop.f32.mrf.mxu0
    %v602 = vadd.f32 %v553, %v601
    %603 = vmatmul.bf16.gmra.mxu0 %v153
    %v604 = vpop.f32.mrf.mxu0
    %v605 = vadd.f32 %v556, %v604
    %v606 = vpop.f32.mrf.mxu0
    %v607 = vadd.f32 %v558, %v606
    %608 = vmatmul.bf16.gmra.mxu0 %v157
    %v609 = vpop.f32.mrf.mxu0
    %v610 = vadd.f32 %v561, %v609
    %v611 = vpop.f32.mrf.mxu0
    %v612 = vadd.f32 %v563, %v611
    %613 = vmatmul.bf16.gmra.mxu0 %v161
    %v614 = vpop.f32.mrf.mxu0
    %v615 = vadd.f32 %v566, %v614
    %v616 = vpop.f32.mrf.mxu0
    %v617 = vadd.f32 %v568, %v616
    %618 = vmatmul.bf16.gmra.mxu0 %v165
    %v619 = vpop.f32.mrf.mxu0
    %v620 = vadd.f32 %v571, %v619
    %v621 = vpop.f32.mrf.mxu0
    %v622 = vadd.f32 %v573, %v621
    %623 = vmatmul.bf16.gmra.mxu0 %v169
    %v624 = vpop.f32.mrf.mxu0
    %v625 = vadd.f32 %v576, %v624
    %v626 = vpop.f32.mrf.mxu0
    %v627 = vadd.f32 %v578, %v626
    %628 = vmatmul.bf16.gmra.mxu0 %v173
    %v629 = vpop.f32.mrf.mxu0
    %v630 = vadd.f32 %v581, %v629
    %v631 = vpop.f32.mrf.mxu0
    %v632 = vadd.f32 %v583, %v631
    %633 = vdwg.mxu0
    %v642 = vunpack.c.l.b16 %v174
    %v643 = vunpack.c.l.b16 %v175
    %v644 = vunpack.c.l.b16 %v176
    %v645 = vunpack.c.l.b16 %v177
    %v646 = vunpack.c.l.b16 %v178
    %v647 = vunpack.c.l.b16 %v179
    %v648 = vunpack.c.l.b16 %v180
    %v649 = vunpack.c.l.b16 %v181
    %v650 = vpack.c.b16 %v643, %v642
    %v651 = vpack.c.b16 %v645, %v644
    %v652 = vpack.c.b16 %v647, %v646
    %v653 = vpack.c.b16 %v649, %v648
    %vm658 = vcmask 523264
    %v660 = vsel %vm658, %v70, 0
    %v663 = vsel %vm658, %v71, 0
    %v666 = vsel %vm658, %v72, 0
    %v669 = vsel %vm658, %v73, 0
    %v672 = vsel %vm658, %v74, 0
    %v675 = vsel %vm658, %v75, 0
    %v678 = vsel %vm658, %v76, 0
    %v681 = vsel %vm658, %v77, 0
    %683 = vmatpush.bf16.msra.mxu0 0
    %684 = vmatpush.bf16.msra.mxu0 0
    %685 = vmatpush.bf16.msra.mxu0 0
    %686 = vmatpush.bf16.msra.mxu0 0
    %687 = vmatpush.bf16.msra.mxu0 %v653
    %688 = vmatpush.bf16.msra.mxu0 %v652
    %689 = vmatpush.bf16.msra.mxu0 %v651
    %690 = vmatpush.bf16.msra.mxu0 %v650
    %691 = vmatmul.bf16.gmra.mxu0 %v660
    %v692 = vpop.f32.mrf.mxu0
    %v693 = vadd.f32 %v595, %v692
    %v694 = vpop.f32.mrf.mxu0
    %v695 = vadd.f32 %v597, %v694
    %696 = vmatmul.bf16.gmra.mxu0 %v663
    %v697 = vpop.f32.mrf.mxu0
    %v698 = vadd.f32 %v600, %v697
    %v699 = vpop.f32.mrf.mxu0
    %v700 = vadd.f32 %v602, %v699
    %701 = vmatmul.bf16.gmra.mxu0 %v666
    %v702 = vpop.f32.mrf.mxu0
    %v703 = vadd.f32 %v605, %v702
    %v704 = vpop.f32.mrf.mxu0
    %v705 = vadd.f32 %v607, %v704
    %706 = vmatmul.bf16.gmra.mxu0 %v669
    %v707 = vpop.f32.mrf.mxu0
    %v708 = vadd.f32 %v610, %v707
    %v709 = vpop.f32.mrf.mxu0
    %v710 = vadd.f32 %v612, %v709
    %711 = vmatmul.bf16.gmra.mxu0 %v672
    %v712 = vpop.f32.mrf.mxu0
    %v713 = vadd.f32 %v615, %v712
    %v714 = vpop.f32.mrf.mxu0
    %v715 = vadd.f32 %v617, %v714
    %716 = vmatmul.bf16.gmra.mxu0 %v675
    %v717 = vpop.f32.mrf.mxu0
    %v718 = vadd.f32 %v620, %v717
    %v719 = vpop.f32.mrf.mxu0
    %v720 = vadd.f32 %v622, %v719
    %721 = vmatmul.bf16.gmra.mxu0 %v678
    %v722 = vpop.f32.mrf.mxu0
    %v723 = vadd.f32 %v625, %v722
    %v724 = vpop.f32.mrf.mxu0
    %v725 = vadd.f32 %v627, %v724
    %726 = vmatmul.bf16.gmra.mxu0 %v681
    %v727 = vpop.f32.mrf.mxu0
    %v728 = vadd.f32 %v630, %v727
    %v729 = vpop.f32.mrf.mxu0
    %v730 = vadd.f32 %v632, %v729
    %731 = vdwg.mxu0
    %v732 = vld [vmem:[%s4] sm:$0x1]
    %v734 = vperm.slane %v732, 0
    %v736 = vadd.f32 %v693, %v734
    %v737 = vadd.f32 %v695, %v734
    %v738 = vadd.f32 %v698, %v734
    %v739 = vadd.f32 %v700, %v734
    %v740 = vadd.f32 %v703, %v734
    %v741 = vadd.f32 %v705, %v734
    %v742 = vadd.f32 %v708, %v734
    %v743 = vadd.f32 %v710, %v734
    %v744 = vadd.f32 %v713, %v734
    %v745 = vadd.f32 %v715, %v734
    %v746 = vadd.f32 %v718, %v734
    %v747 = vadd.f32 %v720, %v734
    %v748 = vadd.f32 %v723, %v734
    %v749 = vadd.f32 %v725, %v734
    %v750 = vadd.f32 %v728, %v734
    %v751 = vadd.f32 %v730, %v734
    %v752 = vand.u32 2147483647, %v736
    %vm753 = vcmp.le.f32.partialorder %v752, 0.7853982
    %vm754 = vcmp.lt.s32.totalorder %v736, 0
    %v755 = vand.u32 %v736, 2139095040
    %v756 = vshrl.u32 %v755, 23
    %v757 = vsub.s32 %v756, 127
    %v758 = vand.u32 2147483647, %v736
    %v759 = vand.u32 %v758, 8388607
    %v760 = vor.u32 %v759, 8388608
    %v761 = vsub.s32 0, %v760
    %v762 = vadd.s32 %v757, 1
    %vm763 = vcmp.gt.s32.totalorder %v762, 0
    %v764 = vsel %vm763, %v762, 0
    %v765 = vshrl.u32 %v764, 5
    %v766 = vand.u32 %v764, 31
    %v767 = vsub.s32 32, %v766
    %v768 = vshrl.u32 683565275, %v767
    %v769 = vshll.u32 683565275, %v766
    %v770 = vshrl.u32 2475754826, %v767
    %v771 = vor.u32 %v769, %v770
    %v772 = vshll.u32 2475754826, %v766
    %v773 = vshrl.u32 2131351028, %v767
    %v774 = vor.u32 %v772, %v773
    %v775 = vshll.u32 2131351028, %v766
    %v776 = vshrl.u32 2102212464, %v767
    %v777 = vor.u32 %v775, %v776
    %v778 = vshll.u32 2102212464, %v766
    %v779 = vshrl.u32 920167782, %v767
    %v780 = vor.u32 %v778, %v779
    %v781 = vshll.u32 920167782, %v766
    %v782 = vshrl.u32 1326507024, %v767
    %v783 = vor.u32 %v781, %v782
    %vm784 = vcmp.lt.s32.totalorder %v765, 1
    %vm785 = vcmp.lt.s32.totalorder %v765, 2
    %vm786 = vcmp.lt.s32.totalorder %v765, 3
    %vm787 = vcmp.lt.s32.totalorder %v765, 4
    %v788 = vsel %vm784, %v768, %v771
    %v789 = vsel %vm787, %v777, 2102212464
    %v790 = vsel %vm786, %v774, %v789
    %v791 = vsel %vm785, %v788, %v790
    %v792 = vsel %vm784, %v771, %v774
    %v793 = vsel %vm787, %v780, 920167782
    %v794 = vsel %vm786, %v777, %v793
    %v795 = vsel %vm785, %v792, %v794
    %v796 = vsel %vm784, %v774, %v777
    %v797 = vsel %vm787, %v783, 1326507024
    %v798 = vsel %vm786, %v780, %v797
    %v799 = vsel %vm785, %v796, %v798
    %v800 = vshll.u32 %v760, 8
    %v801 = vand.u32 %v800, 65535
    %v802 = vshrl.u32 %v800, 16
    %v803 = vand.u32 %v799, 65535
    %v804 = vshrl.u32 %v799, 16
    %v805 = vmul.u32 %v801, %v803
    %v806 = vmul.u32 %v801, %v804
    %v807 = vmul.u32 %v802, %v803
    %v808 = vmul.u32 %v802, %v804
    %v809 = vshll.u32 %v806, 16
    %v810 = vshrl.u32 %v806, 16
    %v811 = vshll.u32 %v807, 16
    %v812 = vshrl.u32 %v807, 16
    %vm813 = vc.u32 %v805, %v809
    %v814 = vsel %vm813, 1, 0
    %v815 = vadd.s32 %v805, %v809
    %v816 = vadd.s32 %v808, %v814
    %vm817 = vc.u32 %v815, %v811
    %v818 = vsel %vm817, 1, 0
    %v819 = vadd.s32 %v815, %v811
    %v820 = vadd.s32 %v816, %v818
    %v821 = vadd.s32 %v820, %v810
    %v822 = vadd.s32 %v821, %v812
    %v823 = vand.u32 %v800, 65535
    %v824 = vshrl.u32 %v800, 16
    %v825 = vand.u32 %v795, 65535
    %v826 = vshrl.u32 %v795, 16
    %v827 = vmul.u32 %v823, %v825
    %v828 = vmul.u32 %v823, %v826
    %v829 = vmul.u32 %v824, %v825
    %v830 = vmul.u32 %v824, %v826
    %v831 = vshll.u32 %v828, 16
    %v832 = vshrl.u32 %v828, 16
    %v833 = vshll.u32 %v829, 16
    %v834 = vshrl.u32 %v829, 16
    %vm835 = vc.u32 %v827, %v831
    %v836 = vsel %vm835, 1, 0
    %v837 = vadd.s32 %v827, %v831
    %v838 = vadd.s32 %v830, %v836
    %vm839 = vc.u32 %v837, %v833
    %v840 = vsel %vm839, 1, 0
    %v841 = vadd.s32 %v837, %v833
    %v842 = vadd.s32 %v838, %v840
    %v843 = vadd.s32 %v842, %v832
    %v844 = vadd.s32 %v843, %v834
    %v845 = vmul.u32 %v800, %v791
    %v846 = vadd.s32 %v822, %v841
    %vm847 = vc.u32 %v822, %v841
    %v848 = vadd.s32 %v844, 1
    %v849 = vsel %vm847, %v848, %v844
    %v850 = vadd.s32 %v845, %v849
    %v851 = vadd.s32 %v850, 536870912
    %v852 = vshrl.u32 %v851, 30
    %v853 = vshll.u32 %v852, 30
    %v854 = vsub.s32 %v850, %v853
    %vm855 = vcmp.lt.s32.totalorder %v854, 0
    %v856 = vsub.s32 0, %v854
    %v857 = vsel %vm855, %v856, %v854
    %v858 = vclz %v857
    %v859 = vsub.s32 %v858, 2
    %vm860 = vcmp.gt.s32.totalorder 0, %v859
    %v861 = vsel %vm860, 0, %v859
    %v862 = vsub.s32 32, %v861
    %v863 = vshll.u32 %v854, %v861
    %v864 = vshrl.u32 %v846, %v862
    %v865 = vor.u32 %v863, %v864
    %v866 = vsub.s32 4294967266, %v861
    %v867 = vadd.s32 %v866, 127
    %v868 = vshll.u32 %v867, 23
    %v869 = vor.u32 4788187, %v868
    %v870 = vand.u32 2147483647, %v869
    %v872 = vcvt.s32.f32 %v865
    %v873 = vmul.f32 %v872, %v870
    %v874 = vxor.u32 %v873, 2147483648
    %v875 = vsel %vm754, %v874, %v873
    %v876 = vsub.s32 4, %v852
    %v877 = vsel %vm754, %v876, %v852
    %v878 = vsel %vm753, %v736, %v875
    %v879 = vsel %vm753, 0, %v877
    %v880 = vmul.f32 %v878, %v878
    %v881 = vmul.f32 %v880, -0.001358992
    %v882 = vadd.f32 %v881, 0.041655596
    %v883 = vmul.f32 %v880, %v882
    %v884 = vadd.f32 %v883, -0.4999988
    %v885 = vmul.f32 %v880, %v884
    %v886 = vadd.f32 1.0, %v885
    %v887 = vmul.f32 %v878, %v878
    %v888 = vmul.f32 %v887, -0.00019511016
    %v889 = vadd.f32 %v888, 0.008332121
    %v890 = vmul.f32 %v887, %v889
    %v891 = vadd.f32 %v890, -0.16666654
    %v892 = vmul.f32 %v887, %v891
    %v893 = vadd.f32 %v892, 1.0
    %v894 = vmul.f32 %v893, %v878
    %vm895 = vweird.f32 %v736
    %v896 = vadd.s32 %v879, 3
    %v897 = vand.u32 %v896, 3
    %vm898 = vcmp.lt.s32.totalorder %v897, 2
    %vm899 = vcmp.eq.s32.totalorder %v897, 0
    %v900 = vxor.u32 %v894, 2147483648
    %v901 = vsel %vm899, %v886, %v900
    %vm902 = vcmp.eq.s32.totalorder %v897, 2
    %v903 = vxor.u32 %v886, 2147483648
    %v904 = vsel %vm902, %v903, %v894
    %v905 = vsel %vm898, %v901, %v904
    %v906 = vsel %vm895, nan, %v905
    %v907 = vand.u32 2147483647, %v737
    %vm908 = vcmp.le.f32.partialorder %v907, 0.7853982
    %vm909 = vcmp.lt.s32.totalorder %v737, 0
    %v910 = vand.u32 %v737, 2139095040
    %v911 = vshrl.u32 %v910, 23
    %v912 = vsub.s32 %v911, 127
    %v913 = vand.u32 2147483647, %v737
    %v914 = vand.u32 %v913, 8388607
    %v915 = vor.u32 %v914, 8388608
    %v916 = vsub.s32 0, %v915
    %v917 = vadd.s32 %v912, 1
    %vm918 = vcmp.gt.s32.totalorder %v917, 0
    %v919 = vsel %vm918, %v917, 0
    %v920 = vshrl.u32 %v919, 5
    %v921 = vand.u32 %v919, 31
    %v922 = vsub.s32 32, %v921
    %v923 = vshrl.u32 683565275, %v922
    %v924 = vshll.u32 683565275, %v921
    %v925 = vshrl.u32 2475754826, %v922
    %v926 = vor.u32 %v924, %v925
    %v927 = vshll.u32 2475754826, %v921
    %v928 = vshrl.u32 2131351028, %v922
    %v929 = vor.u32 %v927, %v928
    %v930 = vshll.u32 2131351028, %v921
    %v931 = vshrl.u32 2102212464, %v922
    %v932 = vor.u32 %v930, %v931
    %v933 = vshll.u32 2102212464, %v921
    %v934 = vshrl.u32 920167782, %v922
    %v935 = vor.u32 %v933, %v934
    %v936 = vshll.u32 920167782, %v921
    %v937 = vshrl.u32 1326507024, %v922
    %v938 = vor.u32 %v936, %v937
    %vm939 = vcmp.lt.s32.totalorder %v920, 1
    %vm940 = vcmp.lt.s32.totalorder %v920, 2
    %vm941 = vcmp.lt.s32.totalorder %v920, 3
    %vm942 = vcmp.lt.s32.totalorder %v920, 4
    %v943 = vsel %vm939, %v923, %v926
    %v944 = vsel %vm942, %v932, 2102212464
    %v945 = vsel %vm941, %v929, %v944
    %v946 = vsel %vm940, %v943, %v945
    %v947 = vsel %vm939, %v926, %v929
    %v948 = vsel %vm942, %v935, 920167782
    %v949 = vsel %vm941, %v932, %v948
    %v950 = vsel %vm940, %v947, %v949
    %v951 = vsel %vm939, %v929, %v932
    %v952 = vsel %vm942, %v938, 1326507024
    %v953 = vsel %vm941, %v935, %v952
    %v954 = vsel %vm940, %v951, %v953
    %v955 = vshll.u32 %v915, 8
    %v956 = vand.u32 %v955, 65535
    %v957 = vshrl.u32 %v955, 16
    %v958 = vand.u32 %v954, 65535
    %v959 = vshrl.u32 %v954, 16
    %v960 = vmul.u32 %v956, %v958
    %v961 = vmul.u32 %v956, %v959
    %v962 = vmul.u32 %v957, %v958
    %v963 = vmul.u32 %v957, %v959
    %v964 = vshll.u32 %v961, 16
    %v965 = vshrl.u32 %v961, 16
    %v966 = vshll.u32 %v962, 16
    %v967 = vshrl.u32 %v962, 16
    %vm968 = vc.u32 %v960, %v964
    %v969 = vsel %vm968, 1, 0
    %v970 = vadd.s32 %v960, %v964
    %v971 = vadd.s32 %v963, %v969
    %vm972 = vc.u32 %v970, %v966
    %v973 = vsel %vm972, 1, 0
    %v974 = vadd.s32 %v970, %v966
    %v975 = vadd.s32 %v971, %v973
    %v976 = vadd.s32 %v975, %v965
    %v977 = vadd.s32 %v976, %v967
    %v978 = vand.u32 %v955, 65535
    %v979 = vshrl.u32 %v955, 16
    %v980 = vand.u32 %v950, 65535
    %v981 = vshrl.u32 %v950, 16
    %v982 = vmul.u32 %v978, %v980
    %v983 = vmul.u32 %v978, %v981
    %v984 = vmul.u32 %v979, %v980
    %v985 = vmul.u32 %v979, %v981
    %v986 = vshll.u32 %v983, 16
    %v987 = vshrl.u32 %v983, 16
    %v988 = vshll.u32 %v984, 16
    %v989 = vshrl.u32 %v984, 16
    %vm990 = vc.u32 %v982, %v986
    %v991 = vsel %vm990, 1, 0
    %v992 = vadd.s32 %v982, %v986
    %v993 = vadd.s32 %v985, %v991
    %vm994 = vc.u32 %v992, %v988
    %v995 = vsel %vm994, 1, 0
    %v996 = vadd.s32 %v992, %v988
    %v997 = vadd.s32 %v993, %v995
    %v998 = vadd.s32 %v997, %v987
    %v999 = vadd.s32 %v998, %v989
    %v1000 = vmul.u32 %v955, %v946
    %v1001 = vadd.s32 %v977, %v996
    %vm1002 = vc.u32 %v977, %v996
    %v1003 = vadd.s32 %v999, 1
    %v1004 = vsel %vm1002, %v1003, %v999
    %v1005 = vadd.s32 %v1000, %v1004
    %v1006 = vadd.s32 %v1005, 536870912
    %v1007 = vshrl.u32 %v1006, 30
    %v1008 = vshll.u32 %v1007, 30
    %v1009 = vsub.s32 %v1005, %v1008
    %vm1010 = vcmp.lt.s32.totalorder %v1009, 0
    %v1011 = vsub.s32 0, %v1009
    %v1012 = vsel %vm1010, %v1011, %v1009
    %v1013 = vclz %v1012
    %v1014 = vsub.s32 %v1013, 2
    %vm1015 = vcmp.gt.s32.totalorder 0, %v1014
    %v1016 = vsel %vm1015, 0, %v1014
    %v1017 = vsub.s32 32, %v1016
    %v1018 = vshll.u32 %v1009, %v1016
    %v1019 = vshrl.u32 %v1001, %v1017
    %v1020 = vor.u32 %v1018, %v1019
    %v1021 = vsub.s32 4294967266, %v1016
    %v1022 = vadd.s32 %v1021, 127
    %v1023 = vshll.u32 %v1022, 23
    %v1024 = vor.u32 4788187, %v1023
    %v1025 = vand.u32 2147483647, %v1024
    %v1027 = vcvt.s32.f32 %v1020
    %v1028 = vmul.f32 %v1027, %v1025
    %v1029 = vxor.u32 %v1028, 2147483648
    %v1030 = vsel %vm909, %v1029, %v1028
    %v1031 = vsub.s32 4, %v1007
    %v1032 = vsel %vm909, %v1031, %v1007
    %v1033 = vsel %vm908, %v737, %v1030
    %v1034 = vsel %vm908, 0, %v1032
    %v1035 = vmul.f32 %v1033, %v1033
    %v1036 = vmul.f32 %v1035, -0.001358992
    %v1037 = vadd.f32 %v1036, 0.041655596
    %v1038 = vmul.f32 %v1035, %v1037
    %v1039 = vadd.f32 %v1038, -0.4999988
    %v1040 = vmul.f32 %v1035, %v1039
    %v1041 = vadd.f32 1.0, %v1040
    %v1042 = vmul.f32 %v1033, %v1033
    %v1043 = vmul.f32 %v1042, -0.00019511016
    %v1044 = vadd.f32 %v1043, 0.008332121
    %v1045 = vmul.f32 %v1042, %v1044
    %v1046 = vadd.f32 %v1045, -0.16666654
    %v1047 = vmul.f32 %v1042, %v1046
    %v1048 = vadd.f32 %v1047, 1.0
    %v1049 = vmul.f32 %v1048, %v1033
    %vm1050 = vweird.f32 %v737
    %v1051 = vadd.s32 %v1034, 3
    %v1052 = vand.u32 %v1051, 3
    %vm1053 = vcmp.lt.s32.totalorder %v1052, 2
    %vm1054 = vcmp.eq.s32.totalorder %v1052, 0
    %v1055 = vxor.u32 %v1049, 2147483648
    %v1056 = vsel %vm1054, %v1041, %v1055
    %vm1057 = vcmp.eq.s32.totalorder %v1052, 2
    %v1058 = vxor.u32 %v1041, 2147483648
    %v1059 = vsel %vm1057, %v1058, %v1049
    %v1060 = vsel %vm1053, %v1056, %v1059
    %v1061 = vsel %vm1050, nan, %v1060
    %v1062 = vand.u32 2147483647, %v738
    %vm1063 = vcmp.le.f32.partialorder %v1062, 0.7853982
    %vm1064 = vcmp.lt.s32.totalorder %v738, 0
    %v1065 = vand.u32 %v738, 2139095040
    %v1066 = vshrl.u32 %v1065, 23
    %v1067 = vsub.s32 %v1066, 127
    %v1068 = vand.u32 2147483647, %v738
    %v1069 = vand.u32 %v1068, 8388607
    %v1070 = vor.u32 %v1069, 8388608
    %v1071 = vsub.s32 0, %v1070
    %v1072 = vadd.s32 %v1067, 1
    %vm1073 = vcmp.gt.s32.totalorder %v1072, 0
    %v1074 = vsel %vm1073, %v1072, 0
    %v1075 = vshrl.u32 %v1074, 5
    %v1076 = vand.u32 %v1074, 31
    %v1077 = vsub.s32 32, %v1076
    %v1078 = vshrl.u32 683565275, %v1077
    %v1079 = vshll.u32 683565275, %v1076
    %v1080 = vshrl.u32 2475754826, %v1077
    %v1081 = vor.u32 %v1079, %v1080
    %v1082 = vshll.u32 2475754826, %v1076
    %v1083 = vshrl.u32 2131351028, %v1077
    %v1084 = vor.u32 %v1082, %v1083
    %v1085 = vshll.u32 2131351028, %v1076
    %v1086 = vshrl.u32 2102212464, %v1077
    %v1087 = vor.u32 %v1085, %v1086
    %v1088 = vshll.u32 2102212464, %v1076
    %v1089 = vshrl.u32 920167782, %v1077
    %v1090 = vor.u32 %v1088, %v1089
    %v1091 = vshll.u32 920167782, %v1076
    %v1092 = vshrl.u32 1326507024, %v1077
    %v1093 = vor.u32 %v1091, %v1092
    %vm1094 = vcmp.lt.s32.totalorder %v1075, 1
    %vm1095 = vcmp.lt.s32.totalorder %v1075, 2
    %vm1096 = vcmp.lt.s32.totalorder %v1075, 3
    %vm1097 = vcmp.lt.s32.totalorder %v1075, 4
    %v1098 = vsel %vm1094, %v1078, %v1081
    %v1099 = vsel %vm1097, %v1087, 2102212464
    %v1100 = vsel %vm1096, %v1084, %v1099
    %v1101 = vsel %vm1095, %v1098, %v1100
    %v1102 = vsel %vm1094, %v1081, %v1084
    %v1103 = vsel %vm1097, %v1090, 920167782
    %v1104 = vsel %vm1096, %v1087, %v1103
    %v1105 = vsel %vm1095, %v1102, %v1104
    %v1106 = vsel %vm1094, %v1084, %v1087
    %v1107 = vsel %vm1097, %v1093, 1326507024
    %v1108 = vsel %vm1096, %v1090, %v1107
    %v1109 = vsel %vm1095, %v1106, %v1108
    %v1110 = vshll.u32 %v1070, 8
    %v1111 = vand.u32 %v1110, 65535
    %v1112 = vshrl.u32 %v1110, 16
    %v1113 = vand.u32 %v1109, 65535
    %v1114 = vshrl.u32 %v1109, 16
    %v1115 = vmul.u32 %v1111, %v1113
    %v1116 = vmul.u32 %v1111, %v1114
    %v1117 = vmul.u32 %v1112, %v1113
    %v1118 = vmul.u32 %v1112, %v1114
    %v1119 = vshll.u32 %v1116, 16
    %v1120 = vshrl.u32 %v1116, 16
    %v1121 = vshll.u32 %v1117, 16
    %v1122 = vshrl.u32 %v1117, 16
    %vm1123 = vc.u32 %v1115, %v1119
    %v1124 = vsel %vm1123, 1, 0
    %v1125 = vadd.s32 %v1115, %v1119
    %v1126 = vadd.s32 %v1118, %v1124
    %vm1127 = vc.u32 %v1125, %v1121
    %v1128 = vsel %vm1127, 1, 0
    %v1129 = vadd.s32 %v1125, %v1121
    %v1130 = vadd.s32 %v1126, %v1128
    %v1131 = vadd.s32 %v1130, %v1120
    %v1132 = vadd.s32 %v1131, %v1122
    %v1133 = vand.u32 %v1110, 65535
    %v1134 = vshrl.u32 %v1110, 16
    %v1135 = vand.u32 %v1105, 65535
    %v1136 = vshrl.u32 %v1105, 16
    %v1137 = vmul.u32 %v1133, %v1135
    %v1138 = vmul.u32 %v1133, %v1136
    %v1139 = vmul.u32 %v1134, %v1135
    %v1140 = vmul.u32 %v1134, %v1136
    %v1141 = vshll.u32 %v1138, 16
    %v1142 = vshrl.u32 %v1138, 16
    %v1143 = vshll.u32 %v1139, 16
    %v1144 = vshrl.u32 %v1139, 16
    %vm1145 = vc.u32 %v1137, %v1141
    %v1146 = vsel %vm1145, 1, 0
    %v1147 = vadd.s32 %v1137, %v1141
    %v1148 = vadd.s32 %v1140, %v1146
    %vm1149 = vc.u32 %v1147, %v1143
    %v1150 = vsel %vm1149, 1, 0
    %v1151 = vadd.s32 %v1147, %v1143
    %v1152 = vadd.s32 %v1148, %v1150
    %v1153 = vadd.s32 %v1152, %v1142
    %v1154 = vadd.s32 %v1153, %v1144
    %v1155 = vmul.u32 %v1110, %v1101
    %v1156 = vadd.s32 %v1132, %v1151
    %vm1157 = vc.u32 %v1132, %v1151
    %v1158 = vadd.s32 %v1154, 1
    %v1159 = vsel %vm1157, %v1158, %v1154
    %v1160 = vadd.s32 %v1155, %v1159
    %v1161 = vadd.s32 %v1160, 536870912
    %v1162 = vshrl.u32 %v1161, 30
    %v1163 = vshll.u32 %v1162, 30
    %v1164 = vsub.s32 %v1160, %v1163
    %vm1165 = vcmp.lt.s32.totalorder %v1164, 0
    %v1166 = vsub.s32 0, %v1164
    %v1167 = vsel %vm1165, %v1166, %v1164
    %v1168 = vclz %v1167
    %v1169 = vsub.s32 %v1168, 2
    %vm1170 = vcmp.gt.s32.totalorder 0, %v1169
    %v1171 = vsel %vm1170, 0, %v1169
    %v1172 = vsub.s32 32, %v1171
    %v1173 = vshll.u32 %v1164, %v1171
    %v1174 = vshrl.u32 %v1156, %v1172
    %v1175 = vor.u32 %v1173, %v1174
    %v1176 = vsub.s32 4294967266, %v1171
    %v1177 = vadd.s32 %v1176, 127
    %v1178 = vshll.u32 %v1177, 23
    %v1179 = vor.u32 4788187, %v1178
    %v1180 = vand.u32 2147483647, %v1179
    %v1182 = vcvt.s32.f32 %v1175
    %v1183 = vmul.f32 %v1182, %v1180
    %v1184 = vxor.u32 %v1183, 2147483648
    %v1185 = vsel %vm1064, %v1184, %v1183
    %v1186 = vsub.s32 4, %v1162
    %v1187 = vsel %vm1064, %v1186, %v1162
    %v1188 = vsel %vm1063, %v738, %v1185
    %v1189 = vsel %vm1063, 0, %v1187
    %v1190 = vmul.f32 %v1188, %v1188
    %v1191 = vmul.f32 %v1190, -0.001358992
    %v1192 = vadd.f32 %v1191, 0.041655596
    %v1193 = vmul.f32 %v1190, %v1192
    %v1194 = vadd.f32 %v1193, -0.4999988
    %v1195 = vmul.f32 %v1190, %v1194
    %v1196 = vadd.f32 1.0, %v1195
    %v1197 = vmul.f32 %v1188, %v1188
    %v1198 = vmul.f32 %v1197, -0.00019511016
    %v1199 = vadd.f32 %v1198, 0.008332121
    %v1200 = vmul.f32 %v1197, %v1199
    %v1201 = vadd.f32 %v1200, -0.16666654
    %v1202 = vmul.f32 %v1197, %v1201
    %v1203 = vadd.f32 %v1202, 1.0
    %v1204 = vmul.f32 %v1203, %v1188
    %vm1205 = vweird.f32 %v738
    %v1206 = vadd.s32 %v1189, 3
    %v1207 = vand.u32 %v1206, 3
    %vm1208 = vcmp.lt.s32.totalorder %v1207, 2
    %vm1209 = vcmp.eq.s32.totalorder %v1207, 0
    %v1210 = vxor.u32 %v1204, 2147483648
    %v1211 = vsel %vm1209, %v1196, %v1210
    %vm1212 = vcmp.eq.s32.totalorder %v1207, 2
    %v1213 = vxor.u32 %v1196, 2147483648
    %v1214 = vsel %vm1212, %v1213, %v1204
    %v1215 = vsel %vm1208, %v1211, %v1214
    %v1216 = vsel %vm1205, nan, %v1215
    %v1217 = vand.u32 2147483647, %v739
    %vm1218 = vcmp.le.f32.partialorder %v1217, 0.7853982
    %vm1219 = vcmp.lt.s32.totalorder %v739, 0
    %v1220 = vand.u32 %v739, 2139095040
    %v1221 = vshrl.u32 %v1220, 23
    %v1222 = vsub.s32 %v1221, 127
    %v1223 = vand.u32 2147483647, %v739
    %v1224 = vand.u32 %v1223, 8388607
    %v1225 = vor.u32 %v1224, 8388608
    %v1226 = vsub.s32 0, %v1225
    %v1227 = vadd.s32 %v1222, 1
    %vm1228 = vcmp.gt.s32.totalorder %v1227, 0
    %v1229 = vsel %vm1228, %v1227, 0
    %v1230 = vshrl.u32 %v1229, 5
    %v1231 = vand.u32 %v1229, 31
    %v1232 = vsub.s32 32, %v1231
    %v1233 = vshrl.u32 683565275, %v1232
    %v1234 = vshll.u32 683565275, %v1231
    %v1235 = vshrl.u32 2475754826, %v1232
    %v1236 = vor.u32 %v1234, %v1235
    %v1237 = vshll.u32 2475754826, %v1231
    %v1238 = vshrl.u32 2131351028, %v1232
    %v1239 = vor.u32 %v1237, %v1238
    %v1240 = vshll.u32 2131351028, %v1231
    %v1241 = vshrl.u32 2102212464, %v1232
    %v1242 = vor.u32 %v1240, %v1241
    %v1243 = vshll.u32 2102212464, %v1231
    %v1244 = vshrl.u32 920167782, %v1232
    %v1245 = vor.u32 %v1243, %v1244
    %v1246 = vshll.u32 920167782, %v1231
    %v1247 = vshrl.u32 1326507024, %v1232
    %v1248 = vor.u32 %v1246, %v1247
    %vm1249 = vcmp.lt.s32.totalorder %v1230, 1
    %vm1250 = vcmp.lt.s32.totalorder %v1230, 2
    %vm1251 = vcmp.lt.s32.totalorder %v1230, 3
    %vm1252 = vcmp.lt.s32.totalorder %v1230, 4
    %v1253 = vsel %vm1249, %v1233, %v1236
    %v1254 = vsel %vm1252, %v1242, 2102212464
    %v1255 = vsel %vm1251, %v1239, %v1254
    %v1256 = vsel %vm1250, %v1253, %v1255
    %v1257 = vsel %vm1249, %v1236, %v1239
    %v1258 = vsel %vm1252, %v1245, 920167782
    %v1259 = vsel %vm1251, %v1242, %v1258
    %v1260 = vsel %vm1250, %v1257, %v1259
    %v1261 = vsel %vm1249, %v1239, %v1242
    %v1262 = vsel %vm1252, %v1248, 1326507024
    %v1263 = vsel %vm1251, %v1245, %v1262
    %v1264 = vsel %vm1250, %v1261, %v1263
    %v1265 = vshll.u32 %v1225, 8
    %v1266 = vand.u32 %v1265, 65535
    %v1267 = vshrl.u32 %v1265, 16
    %v1268 = vand.u32 %v1264, 65535
    %v1269 = vshrl.u32 %v1264, 16
    %v1270 = vmul.u32 %v1266, %v1268
    %v1271 = vmul.u32 %v1266, %v1269
    %v1272 = vmul.u32 %v1267, %v1268
    %v1273 = vmul.u32 %v1267, %v1269
    %v1274 = vshll.u32 %v1271, 16
    %v1275 = vshrl.u32 %v1271, 16
    %v1276 = vshll.u32 %v1272, 16
    %v1277 = vshrl.u32 %v1272, 16
    %vm1278 = vc.u32 %v1270, %v1274
    %v1279 = vsel %vm1278, 1, 0
    %v1280 = vadd.s32 %v1270, %v1274
    %v1281 = vadd.s32 %v1273, %v1279
    %vm1282 = vc.u32 %v1280, %v1276
    %v1283 = vsel %vm1282, 1, 0
    %v1284 = vadd.s32 %v1280, %v1276
    %v1285 = vadd.s32 %v1281, %v1283
    %v1286 = vadd.s32 %v1285, %v1275
    %v1287 = vadd.s32 %v1286, %v1277
    %v1288 = vand.u32 %v1265, 65535
    %v1289 = vshrl.u32 %v1265, 16
    %v1290 = vand.u32 %v1260, 65535
    %v1291 = vshrl.u32 %v1260, 16
    %v1292 = vmul.u32 %v1288, %v1290
    %v1293 = vmul.u32 %v1288, %v1291
    %v1294 = vmul.u32 %v1289, %v1290
    %v1295 = vmul.u32 %v1289, %v1291
    %v1296 = vshll.u32 %v1293, 16
    %v1297 = vshrl.u32 %v1293, 16
    %v1298 = vshll.u32 %v1294, 16
    %v1299 = vshrl.u32 %v1294, 16
    %vm1300 = vc.u32 %v1292, %v1296
    %v1301 = vsel %vm1300, 1, 0
    %v1302 = vadd.s32 %v1292, %v1296
    %v1303 = vadd.s32 %v1295, %v1301
    %vm1304 = vc.u32 %v1302, %v1298
    %v1305 = vsel %vm1304, 1, 0
    %v1306 = vadd.s32 %v1302, %v1298
    %v1307 = vadd.s32 %v1303, %v1305
    %v1308 = vadd.s32 %v1307, %v1297
    %v1309 = vadd.s32 %v1308, %v1299
    %v1310 = vmul.u32 %v1265, %v1256
    %v1311 = vadd.s32 %v1287, %v1306
    %vm1312 = vc.u32 %v1287, %v1306
    %v1313 = vadd.s32 %v1309, 1
    %v1314 = vsel %vm1312, %v1313, %v1309
    %v1315 = vadd.s32 %v1310, %v1314
    %v1316 = vadd.s32 %v1315, 536870912
    %v1317 = vshrl.u32 %v1316, 30
    %v1318 = vshll.u32 %v1317, 30
    %v1319 = vsub.s32 %v1315, %v1318
    %vm1320 = vcmp.lt.s32.totalorder %v1319, 0
    %v1321 = vsub.s32 0, %v1319
    %v1322 = vsel %vm1320, %v1321, %v1319
    %v1323 = vclz %v1322
    %v1324 = vsub.s32 %v1323, 2
    %vm1325 = vcmp.gt.s32.totalorder 0, %v1324
    %v1326 = vsel %vm1325, 0, %v1324
    %v1327 = vsub.s32 32, %v1326
    %v1328 = vshll.u32 %v1319, %v1326
    %v1329 = vshrl.u32 %v1311, %v1327
    %v1330 = vor.u32 %v1328, %v1329
    %v1331 = vsub.s32 4294967266, %v1326
    %v1332 = vadd.s32 %v1331, 127
    %v1333 = vshll.u32 %v1332, 23
    %v1334 = vor.u32 4788187, %v1333
    %v1335 = vand.u32 2147483647, %v1334
    %v1337 = vcvt.s32.f32 %v1330
    %v1338 = vmul.f32 %v1337, %v1335
    %v1339 = vxor.u32 %v1338, 2147483648
    %v1340 = vsel %vm1219, %v1339, %v1338
    %v1341 = vsub.s32 4, %v1317
    %v1342 = vsel %vm1219, %v1341, %v1317
    %v1343 = vsel %vm1218, %v739, %v1340
    %v1344 = vsel %vm1218, 0, %v1342
    %v1345 = vmul.f32 %v1343, %v1343
    %v1346 = vmul.f32 %v1345, -0.001358992
    %v1347 = vadd.f32 %v1346, 0.041655596
    %v1348 = vmul.f32 %v1345, %v1347
    %v1349 = vadd.f32 %v1348, -0.4999988
    %v1350 = vmul.f32 %v1345, %v1349
    %v1351 = vadd.f32 1.0, %v1350
    %v1352 = vmul.f32 %v1343, %v1343
    %v1353 = vmul.f32 %v1352, -0.00019511016
    %v1354 = vadd.f32 %v1353, 0.008332121
    %v1355 = vmul.f32 %v1352, %v1354
    %v1356 = vadd.f32 %v1355, -0.16666654
    %v1357 = vmul.f32 %v1352, %v1356
    %v1358 = vadd.f32 %v1357, 1.0
    %v1359 = vmul.f32 %v1358, %v1343
    %vm1360 = vweird.f32 %v739
    %v1361 = vadd.s32 %v1344, 3
    %v1362 = vand.u32 %v1361, 3
    %vm1363 = vcmp.lt.s32.totalorder %v1362, 2
    %vm1364 = vcmp.eq.s32.totalorder %v1362, 0
    %v1365 = vxor.u32 %v1359, 2147483648
    %v1366 = vsel %vm1364, %v1351, %v1365
    %vm1367 = vcmp.eq.s32.totalorder %v1362, 2
    %v1368 = vxor.u32 %v1351, 2147483648
    %v1369 = vsel %vm1367, %v1368, %v1359
    %v1370 = vsel %vm1363, %v1366, %v1369
    %v1371 = vsel %vm1360, nan, %v1370
    %v1372 = vand.u32 2147483647, %v740
    %vm1373 = vcmp.le.f32.partialorder %v1372, 0.7853982
    %vm1374 = vcmp.lt.s32.totalorder %v740, 0
    %v1375 = vand.u32 %v740, 2139095040
    %v1376 = vshrl.u32 %v1375, 23
    %v1377 = vsub.s32 %v1376, 127
    %v1378 = vand.u32 2147483647, %v740
    %v1379 = vand.u32 %v1378, 8388607
    %v1380 = vor.u32 %v1379, 8388608
    %v1381 = vsub.s32 0, %v1380
    %v1382 = vadd.s32 %v1377, 1
    %vm1383 = vcmp.gt.s32.totalorder %v1382, 0
    %v1384 = vsel %vm1383, %v1382, 0
    %v1385 = vshrl.u32 %v1384, 5
    %v1386 = vand.u32 %v1384, 31
    %v1387 = vsub.s32 32, %v1386
    %v1388 = vshrl.u32 683565275, %v1387
    %v1389 = vshll.u32 683565275, %v1386
    %v1390 = vshrl.u32 2475754826, %v1387
    %v1391 = vor.u32 %v1389, %v1390
    %v1392 = vshll.u32 2475754826, %v1386
    %v1393 = vshrl.u32 2131351028, %v1387
    %v1394 = vor.u32 %v1392, %v1393
    %v1395 = vshll.u32 2131351028, %v1386
    %v1396 = vshrl.u32 2102212464, %v1387
    %v1397 = vor.u32 %v1395, %v1396
    %v1398 = vshll.u32 2102212464, %v1386
    %v1399 = vshrl.u32 920167782, %v1387
    %v1400 = vor.u32 %v1398, %v1399
    %v1401 = vshll.u32 920167782, %v1386
    %v1402 = vshrl.u32 1326507024, %v1387
    %v1403 = vor.u32 %v1401, %v1402
    %vm1404 = vcmp.lt.s32.totalorder %v1385, 1
    %vm1405 = vcmp.lt.s32.totalorder %v1385, 2
    %vm1406 = vcmp.lt.s32.totalorder %v1385, 3
    %vm1407 = vcmp.lt.s32.totalorder %v1385, 4
    %v1408 = vsel %vm1404, %v1388, %v1391
    %v1409 = vsel %vm1407, %v1397, 2102212464
    %v1410 = vsel %vm1406, %v1394, %v1409
    %v1411 = vsel %vm1405, %v1408, %v1410
    %v1412 = vsel %vm1404, %v1391, %v1394
    %v1413 = vsel %vm1407, %v1400, 920167782
    %v1414 = vsel %vm1406, %v1397, %v1413
    %v1415 = vsel %vm1405, %v1412, %v1414
    %v1416 = vsel %vm1404, %v1394, %v1397
    %v1417 = vsel %vm1407, %v1403, 1326507024
    %v1418 = vsel %vm1406, %v1400, %v1417
    %v1419 = vsel %vm1405, %v1416, %v1418
    %v1420 = vshll.u32 %v1380, 8
    %v1421 = vand.u32 %v1420, 65535
    %v1422 = vshrl.u32 %v1420, 16
    %v1423 = vand.u32 %v1419, 65535
    %v1424 = vshrl.u32 %v1419, 16
    %v1425 = vmul.u32 %v1421, %v1423
    %v1426 = vmul.u32 %v1421, %v1424
    %v1427 = vmul.u32 %v1422, %v1423
    %v1428 = vmul.u32 %v1422, %v1424
    %v1429 = vshll.u32 %v1426, 16
    %v1430 = vshrl.u32 %v1426, 16
    %v1431 = vshll.u32 %v1427, 16
    %v1432 = vshrl.u32 %v1427, 16
    %vm1433 = vc.u32 %v1425, %v1429
    %v1434 = vsel %vm1433, 1, 0
    %v1435 = vadd.s32 %v1425, %v1429
    %v1436 = vadd.s32 %v1428, %v1434
    %vm1437 = vc.u32 %v1435, %v1431
    %v1438 = vsel %vm1437, 1, 0
    %v1439 = vadd.s32 %v1435, %v1431
    %v1440 = vadd.s32 %v1436, %v1438
    %v1441 = vadd.s32 %v1440, %v1430
    %v1442 = vadd.s32 %v1441, %v1432
    %v1443 = vand.u32 %v1420, 65535
    %v1444 = vshrl.u32 %v1420, 16
    %v1445 = vand.u32 %v1415, 65535
    %v1446 = vshrl.u32 %v1415, 16
    %v1447 = vmul.u32 %v1443, %v1445
    %v1448 = vmul.u32 %v1443, %v1446
    %v1449 = vmul.u32 %v1444, %v1445
    %v1450 = vmul.u32 %v1444, %v1446
    %v1451 = vshll.u32 %v1448, 16
    %v1452 = vshrl.u32 %v1448, 16
    %v1453 = vshll.u32 %v1449, 16
    %v1454 = vshrl.u32 %v1449, 16
    %vm1455 = vc.u32 %v1447, %v1451
    %v1456 = vsel %vm1455, 1, 0
    %v1457 = vadd.s32 %v1447, %v1451
    %v1458 = vadd.s32 %v1450, %v1456
    %vm1459 = vc.u32 %v1457, %v1453
    %v1460 = vsel %vm1459, 1, 0
    %v1461 = vadd.s32 %v1457, %v1453
    %v1462 = vadd.s32 %v1458, %v1460
    %v1463 = vadd.s32 %v1462, %v1452
    %v1464 = vadd.s32 %v1463, %v1454
    %v1465 = vmul.u32 %v1420, %v1411
    %v1466 = vadd.s32 %v1442, %v1461
    %vm1467 = vc.u32 %v1442, %v1461
    %v1468 = vadd.s32 %v1464, 1
    %v1469 = vsel %vm1467, %v1468, %v1464
    %v1470 = vadd.s32 %v1465, %v1469
    %v1471 = vadd.s32 %v1470, 536870912
    %v1472 = vshrl.u32 %v1471, 30
    %v1473 = vshll.u32 %v1472, 30
    %v1474 = vsub.s32 %v1470, %v1473
    %vm1475 = vcmp.lt.s32.totalorder %v1474, 0
    %v1476 = vsub.s32 0, %v1474
    %v1477 = vsel %vm1475, %v1476, %v1474
    %v1478 = vclz %v1477
    %v1479 = vsub.s32 %v1478, 2
    %vm1480 = vcmp.gt.s32.totalorder 0, %v1479
    %v1481 = vsel %vm1480, 0, %v1479
    %v1482 = vsub.s32 32, %v1481
    %v1483 = vshll.u32 %v1474, %v1481
    %v1484 = vshrl.u32 %v1466, %v1482
    %v1485 = vor.u32 %v1483, %v1484
    %v1486 = vsub.s32 4294967266, %v1481
    %v1487 = vadd.s32 %v1486, 127
    %v1488 = vshll.u32 %v1487, 23
    %v1489 = vor.u32 4788187, %v1488
    %v1490 = vand.u32 2147483647, %v1489
    %v1492 = vcvt.s32.f32 %v1485
    %v1493 = vmul.f32 %v1492, %v1490
    %v1494 = vxor.u32 %v1493, 2147483648
    %v1495 = vsel %vm1374, %v1494, %v1493
    %v1496 = vsub.s32 4, %v1472
    %v1497 = vsel %vm1374, %v1496, %v1472
    %v1498 = vsel %vm1373, %v740, %v1495
    %v1499 = vsel %vm1373, 0, %v1497
    %v1500 = vmul.f32 %v1498, %v1498
    %v1501 = vmul.f32 %v1500, -0.001358992
    %v1502 = vadd.f32 %v1501, 0.041655596
    %v1503 = vmul.f32 %v1500, %v1502
    %v1504 = vadd.f32 %v1503, -0.4999988
    %v1505 = vmul.f32 %v1500, %v1504
    %v1506 = vadd.f32 1.0, %v1505
    %v1507 = vmul.f32 %v1498, %v1498
    %v1508 = vmul.f32 %v1507, -0.00019511016
    %v1509 = vadd.f32 %v1508, 0.008332121
    %v1510 = vmul.f32 %v1507, %v1509
    %v1511 = vadd.f32 %v1510, -0.16666654
    %v1512 = vmul.f32 %v1507, %v1511
    %v1513 = vadd.f32 %v1512, 1.0
    %v1514 = vmul.f32 %v1513, %v1498
    %vm1515 = vweird.f32 %v740
    %v1516 = vadd.s32 %v1499, 3
    %v1517 = vand.u32 %v1516, 3
    %vm1518 = vcmp.lt.s32.totalorder %v1517, 2
    %vm1519 = vcmp.eq.s32.totalorder %v1517, 0
    %v1520 = vxor.u32 %v1514, 2147483648
    %v1521 = vsel %vm1519, %v1506, %v1520
    %vm1522 = vcmp.eq.s32.totalorder %v1517, 2
    %v1523 = vxor.u32 %v1506, 2147483648
    %v1524 = vsel %vm1522, %v1523, %v1514
    %v1525 = vsel %vm1518, %v1521, %v1524
    %v1526 = vsel %vm1515, nan, %v1525
    %v1527 = vand.u32 2147483647, %v741
    %vm1528 = vcmp.le.f32.partialorder %v1527, 0.7853982
    %vm1529 = vcmp.lt.s32.totalorder %v741, 0
    %v1530 = vand.u32 %v741, 2139095040
    %v1531 = vshrl.u32 %v1530, 23
    %v1532 = vsub.s32 %v1531, 127
    %v1533 = vand.u32 2147483647, %v741
    %v1534 = vand.u32 %v1533, 8388607
    %v1535 = vor.u32 %v1534, 8388608
    %v1536 = vsub.s32 0, %v1535
    %v1537 = vadd.s32 %v1532, 1
    %vm1538 = vcmp.gt.s32.totalorder %v1537, 0
    %v1539 = vsel %vm1538, %v1537, 0
    %v1540 = vshrl.u32 %v1539, 5
    %v1541 = vand.u32 %v1539, 31
    %v1542 = vsub.s32 32, %v1541
    %v1543 = vshrl.u32 683565275, %v1542
    %v1544 = vshll.u32 683565275, %v1541
    %v1545 = vshrl.u32 2475754826, %v1542
    %v1546 = vor.u32 %v1544, %v1545
    %v1547 = vshll.u32 2475754826, %v1541
    %v1548 = vshrl.u32 2131351028, %v1542
    %v1549 = vor.u32 %v1547, %v1548
    %v1550 = vshll.u32 2131351028, %v1541
    %v1551 = vshrl.u32 2102212464, %v1542
    %v1552 = vor.u32 %v1550, %v1551
    %v1553 = vshll.u32 2102212464, %v1541
    %v1554 = vshrl.u32 920167782, %v1542
    %v1555 = vor.u32 %v1553, %v1554
    %v1556 = vshll.u32 920167782, %v1541
    %v1557 = vshrl.u32 1326507024, %v1542
    %v1558 = vor.u32 %v1556, %v1557
    %vm1559 = vcmp.lt.s32.totalorder %v1540, 1
    %vm1560 = vcmp.lt.s32.totalorder %v1540, 2
    %vm1561 = vcmp.lt.s32.totalorder %v1540, 3
    %vm1562 = vcmp.lt.s32.totalorder %v1540, 4
    %v1563 = vsel %vm1559, %v1543, %v1546
    %v1564 = vsel %vm1562, %v1552, 2102212464
    %v1565 = vsel %vm1561, %v1549, %v1564
    %v1566 = vsel %vm1560, %v1563, %v1565
    %v1567 = vsel %vm1559, %v1546, %v1549
    %v1568 = vsel %vm1562, %v1555, 920167782
    %v1569 = vsel %vm1561, %v1552, %v1568
    %v1570 = vsel %vm1560, %v1567, %v1569
    %v1571 = vsel %vm1559, %v1549, %v1552
    %v1572 = vsel %vm1562, %v1558, 1326507024
    %v1573 = vsel %vm1561, %v1555, %v1572
    %v1574 = vsel %vm1560, %v1571, %v1573
    %v1575 = vshll.u32 %v1535, 8
    %v1576 = vand.u32 %v1575, 65535
    %v1577 = vshrl.u32 %v1575, 16
    %v1578 = vand.u32 %v1574, 65535
    %v1579 = vshrl.u32 %v1574, 16
    %v1580 = vmul.u32 %v1576, %v1578
    %v1581 = vmul.u32 %v1576, %v1579
    %v1582 = vmul.u32 %v1577, %v1578
    %v1583 = vmul.u32 %v1577, %v1579
    %v1584 = vshll.u32 %v1581, 16
    %v1585 = vshrl.u32 %v1581, 16
    %v1586 = vshll.u32 %v1582, 16
    %v1587 = vshrl.u32 %v1582, 16
    %vm1588 = vc.u32 %v1580, %v1584
    %v1589 = vsel %vm1588, 1, 0
    %v1590 = vadd.s32 %v1580, %v1584
    %v1591 = vadd.s32 %v1583, %v1589
    %vm1592 = vc.u32 %v1590, %v1586
    %v1593 = vsel %vm1592, 1, 0
    %v1594 = vadd.s32 %v1590, %v1586
    %v1595 = vadd.s32 %v1591, %v1593
    %v1596 = vadd.s32 %v1595, %v1585
    %v1597 = vadd.s32 %v1596, %v1587
    %v1598 = vand.u32 %v1575, 65535
    %v1599 = vshrl.u32 %v1575, 16
    %v1600 = vand.u32 %v1570, 65535
    %v1601 = vshrl.u32 %v1570, 16
    %v1602 = vmul.u32 %v1598, %v1600
    %v1603 = vmul.u32 %v1598, %v1601
    %v1604 = vmul.u32 %v1599, %v1600
    %v1605 = vmul.u32 %v1599, %v1601
    %v1606 = vshll.u32 %v1603, 16
    %v1607 = vshrl.u32 %v1603, 16
    %v1608 = vshll.u32 %v1604, 16
    %v1609 = vshrl.u32 %v1604, 16
    %vm1610 = vc.u32 %v1602, %v1606
    %v1611 = vsel %vm1610, 1, 0
    %v1612 = vadd.s32 %v1602, %v1606
    %v1613 = vadd.s32 %v1605, %v1611
    %vm1614 = vc.u32 %v1612, %v1608
    %v1615 = vsel %vm1614, 1, 0
    %v1616 = vadd.s32 %v1612, %v1608
    %v1617 = vadd.s32 %v1613, %v1615
    %v1618 = vadd.s32 %v1617, %v1607
    %v1619 = vadd.s32 %v1618, %v1609
    %v1620 = vmul.u32 %v1575, %v1566
    %v1621 = vadd.s32 %v1597, %v1616
    %vm1622 = vc.u32 %v1597, %v1616
    %v1623 = vadd.s32 %v1619, 1
    %v1624 = vsel %vm1622, %v1623, %v1619
    %v1625 = vadd.s32 %v1620, %v1624
    %v1626 = vadd.s32 %v1625, 536870912
    %v1627 = vshrl.u32 %v1626, 30
    %v1628 = vshll.u32 %v1627, 30
    %v1629 = vsub.s32 %v1625, %v1628
    %vm1630 = vcmp.lt.s32.totalorder %v1629, 0
    %v1631 = vsub.s32 0, %v1629
    %v1632 = vsel %vm1630, %v1631, %v1629
    %v1633 = vclz %v1632
    %v1634 = vsub.s32 %v1633, 2
    %vm1635 = vcmp.gt.s32.totalorder 0, %v1634
    %v1636 = vsel %vm1635, 0, %v1634
    %v1637 = vsub.s32 32, %v1636
    %v1638 = vshll.u32 %v1629, %v1636
    %v1639 = vshrl.u32 %v1621, %v1637
    %v1640 = vor.u32 %v1638, %v1639
    %v1641 = vsub.s32 4294967266, %v1636
    %v1642 = vadd.s32 %v1641, 127
    %v1643 = vshll.u32 %v1642, 23
    %v1644 = vor.u32 4788187, %v1643
    %v1645 = vand.u32 2147483647, %v1644
    %v1647 = vcvt.s32.f32 %v1640
    %v1648 = vmul.f32 %v1647, %v1645
    %v1649 = vxor.u32 %v1648, 2147483648
    %v1650 = vsel %vm1529, %v1649, %v1648
    %v1651 = vsub.s32 4, %v1627
    %v1652 = vsel %vm1529, %v1651, %v1627
    %v1653 = vsel %vm1528, %v741, %v1650
    %v1654 = vsel %vm1528, 0, %v1652
    %v1655 = vmul.f32 %v1653, %v1653
    %v1656 = vmul.f32 %v1655, -0.001358992
    %v1657 = vadd.f32 %v1656, 0.041655596
    %v1658 = vmul.f32 %v1655, %v1657
    %v1659 = vadd.f32 %v1658, -0.4999988
    %v1660 = vmul.f32 %v1655, %v1659
    %v1661 = vadd.f32 1.0, %v1660
    %v1662 = vmul.f32 %v1653, %v1653
    %v1663 = vmul.f32 %v1662, -0.00019511016
    %v1664 = vadd.f32 %v1663, 0.008332121
    %v1665 = vmul.f32 %v1662, %v1664
    %v1666 = vadd.f32 %v1665, -0.16666654
    %v1667 = vmul.f32 %v1662, %v1666
    %v1668 = vadd.f32 %v1667, 1.0
    %v1669 = vmul.f32 %v1668, %v1653
    %vm1670 = vweird.f32 %v741
    %v1671 = vadd.s32 %v1654, 3
    %v1672 = vand.u32 %v1671, 3
    %vm1673 = vcmp.lt.s32.totalorder %v1672, 2
    %vm1674 = vcmp.eq.s32.totalorder %v1672, 0
    %v1675 = vxor.u32 %v1669, 2147483648
    %v1676 = vsel %vm1674, %v1661, %v1675
    %vm1677 = vcmp.eq.s32.totalorder %v1672, 2
    %v1678 = vxor.u32 %v1661, 2147483648
    %v1679 = vsel %vm1677, %v1678, %v1669
    %v1680 = vsel %vm1673, %v1676, %v1679
    %v1681 = vsel %vm1670, nan, %v1680
    %v1682 = vand.u32 2147483647, %v742
    %vm1683 = vcmp.le.f32.partialorder %v1682, 0.7853982
    %vm1684 = vcmp.lt.s32.totalorder %v742, 0
    %v1685 = vand.u32 %v742, 2139095040
    %v1686 = vshrl.u32 %v1685, 23
    %v1687 = vsub.s32 %v1686, 127
    %v1688 = vand.u32 2147483647, %v742
    %v1689 = vand.u32 %v1688, 8388607
    %v1690 = vor.u32 %v1689, 8388608
    %v1691 = vsub.s32 0, %v1690
    %v1692 = vadd.s32 %v1687, 1
    %vm1693 = vcmp.gt.s32.totalorder %v1692, 0
    %v1694 = vsel %vm1693, %v1692, 0
    %v1695 = vshrl.u32 %v1694, 5
    %v1696 = vand.u32 %v1694, 31
    %v1697 = vsub.s32 32, %v1696
    %v1698 = vshrl.u32 683565275, %v1697
    %v1699 = vshll.u32 683565275, %v1696
    %v1700 = vshrl.u32 2475754826, %v1697
    %v1701 = vor.u32 %v1699, %v1700
    %v1702 = vshll.u32 2475754826, %v1696
    %v1703 = vshrl.u32 2131351028, %v1697
    %v1704 = vor.u32 %v1702, %v1703
    %v1705 = vshll.u32 2131351028, %v1696
    %v1706 = vshrl.u32 2102212464, %v1697
    %v1707 = vor.u32 %v1705, %v1706
    %v1708 = vshll.u32 2102212464, %v1696
    %v1709 = vshrl.u32 920167782, %v1697
    %v1710 = vor.u32 %v1708, %v1709
    %v1711 = vshll.u32 920167782, %v1696
    %v1712 = vshrl.u32 1326507024, %v1697
    %v1713 = vor.u32 %v1711, %v1712
    %vm1714 = vcmp.lt.s32.totalorder %v1695, 1
    %vm1715 = vcmp.lt.s32.totalorder %v1695, 2
    %vm1716 = vcmp.lt.s32.totalorder %v1695, 3
    %vm1717 = vcmp.lt.s32.totalorder %v1695, 4
    %v1718 = vsel %vm1714, %v1698, %v1701
    %v1719 = vsel %vm1717, %v1707, 2102212464
    %v1720 = vsel %vm1716, %v1704, %v1719
    %v1721 = vsel %vm1715, %v1718, %v1720
    %v1722 = vsel %vm1714, %v1701, %v1704
    %v1723 = vsel %vm1717, %v1710, 920167782
    %v1724 = vsel %vm1716, %v1707, %v1723
    %v1725 = vsel %vm1715, %v1722, %v1724
    %v1726 = vsel %vm1714, %v1704, %v1707
    %v1727 = vsel %vm1717, %v1713, 1326507024
    %v1728 = vsel %vm1716, %v1710, %v1727
    %v1729 = vsel %vm1715, %v1726, %v1728
    %v1730 = vshll.u32 %v1690, 8
    %v1731 = vand.u32 %v1730, 65535
    %v1732 = vshrl.u32 %v1730, 16
    %v1733 = vand.u32 %v1729, 65535
    %v1734 = vshrl.u32 %v1729, 16
    %v1735 = vmul.u32 %v1731, %v1733
    %v1736 = vmul.u32 %v1731, %v1734
    %v1737 = vmul.u32 %v1732, %v1733
    %v1738 = vmul.u32 %v1732, %v1734
    %v1739 = vshll.u32 %v1736, 16
    %v1740 = vshrl.u32 %v1736, 16
    %v1741 = vshll.u32 %v1737, 16
    %v1742 = vshrl.u32 %v1737, 16
    %vm1743 = vc.u32 %v1735, %v1739
    %v1744 = vsel %vm1743, 1, 0
    %v1745 = vadd.s32 %v1735, %v1739
    %v1746 = vadd.s32 %v1738, %v1744
    %vm1747 = vc.u32 %v1745, %v1741
    %v1748 = vsel %vm1747, 1, 0
    %v1749 = vadd.s32 %v1745, %v1741
    %v1750 = vadd.s32 %v1746, %v1748
    %v1751 = vadd.s32 %v1750, %v1740
    %v1752 = vadd.s32 %v1751, %v1742
    %v1753 = vand.u32 %v1730, 65535
    %v1754 = vshrl.u32 %v1730, 16
    %v1755 = vand.u32 %v1725, 65535
    %v1756 = vshrl.u32 %v1725, 16
    %v1757 = vmul.u32 %v1753, %v1755
    %v1758 = vmul.u32 %v1753, %v1756
    %v1759 = vmul.u32 %v1754, %v1755
    %v1760 = vmul.u32 %v1754, %v1756
    %v1761 = vshll.u32 %v1758, 16
    %v1762 = vshrl.u32 %v1758, 16
    %v1763 = vshll.u32 %v1759, 16
    %v1764 = vshrl.u32 %v1759, 16
    %vm1765 = vc.u32 %v1757, %v1761
    %v1766 = vsel %vm1765, 1, 0
    %v1767 = vadd.s32 %v1757, %v1761
    %v1768 = vadd.s32 %v1760, %v1766
    %vm1769 = vc.u32 %v1767, %v1763
    %v1770 = vsel %vm1769, 1, 0
    %v1771 = vadd.s32 %v1767, %v1763
    %v1772 = vadd.s32 %v1768, %v1770
    %v1773 = vadd.s32 %v1772, %v1762
    %v1774 = vadd.s32 %v1773, %v1764
    %v1775 = vmul.u32 %v1730, %v1721
    %v1776 = vadd.s32 %v1752, %v1771
    %vm1777 = vc.u32 %v1752, %v1771
    %v1778 = vadd.s32 %v1774, 1
    %v1779 = vsel %vm1777, %v1778, %v1774
    %v1780 = vadd.s32 %v1775, %v1779
    %v1781 = vadd.s32 %v1780, 536870912
    %v1782 = vshrl.u32 %v1781, 30
    %v1783 = vshll.u32 %v1782, 30
    %v1784 = vsub.s32 %v1780, %v1783
    %vm1785 = vcmp.lt.s32.totalorder %v1784, 0
    %v1786 = vsub.s32 0, %v1784
    %v1787 = vsel %vm1785, %v1786, %v1784
    %v1788 = vclz %v1787
    %v1789 = vsub.s32 %v1788, 2
    %vm1790 = vcmp.gt.s32.totalorder 0, %v1789
    %v1791 = vsel %vm1790, 0, %v1789
    %v1792 = vsub.s32 32, %v1791
    %v1793 = vshll.u32 %v1784, %v1791
    %v1794 = vshrl.u32 %v1776, %v1792
    %v1795 = vor.u32 %v1793, %v1794
    %v1796 = vsub.s32 4294967266, %v1791
    %v1797 = vadd.s32 %v1796, 127
    %v1798 = vshll.u32 %v1797, 23
    %v1799 = vor.u32 4788187, %v1798
    %v1800 = vand.u32 2147483647, %v1799
    %v1802 = vcvt.s32.f32 %v1795
    %v1803 = vmul.f32 %v1802, %v1800
    %v1804 = vxor.u32 %v1803, 2147483648
    %v1805 = vsel %vm1684, %v1804, %v1803
    %v1806 = vsub.s32 4, %v1782
    %v1807 = vsel %vm1684, %v1806, %v1782
    %v1808 = vsel %vm1683, %v742, %v1805
    %v1809 = vsel %vm1683, 0, %v1807
    %v1810 = vmul.f32 %v1808, %v1808
    %v1811 = vmul.f32 %v1810, -0.001358992
    %v1812 = vadd.f32 %v1811, 0.041655596
    %v1813 = vmul.f32 %v1810, %v1812
    %v1814 = vadd.f32 %v1813, -0.4999988
    %v1815 = vmul.f32 %v1810, %v1814
    %v1816 = vadd.f32 1.0, %v1815
    %v1817 = vmul.f32 %v1808, %v1808
    %v1818 = vmul.f32 %v1817, -0.00019511016
    %v1819 = vadd.f32 %v1818, 0.008332121
    %v1820 = vmul.f32 %v1817, %v1819
    %v1821 = vadd.f32 %v1820, -0.16666654
    %v1822 = vmul.f32 %v1817, %v1821
    %v1823 = vadd.f32 %v1822, 1.0
    %v1824 = vmul.f32 %v1823, %v1808
    %vm1825 = vweird.f32 %v742
    %v1826 = vadd.s32 %v1809, 3
    %v1827 = vand.u32 %v1826, 3
    %vm1828 = vcmp.lt.s32.totalorder %v1827, 2
    %vm1829 = vcmp.eq.s32.totalorder %v1827, 0
    %v1830 = vxor.u32 %v1824, 2147483648
    %v1831 = vsel %vm1829, %v1816, %v1830
    %vm1832 = vcmp.eq.s32.totalorder %v1827, 2
    %v1833 = vxor.u32 %v1816, 2147483648
    %v1834 = vsel %vm1832, %v1833, %v1824
    %v1835 = vsel %vm1828, %v1831, %v1834
    %v1836 = vsel %vm1825, nan, %v1835
    %v1837 = vand.u32 2147483647, %v743
    %vm1838 = vcmp.le.f32.partialorder %v1837, 0.7853982
    %vm1839 = vcmp.lt.s32.totalorder %v743, 0
    %v1840 = vand.u32 %v743, 2139095040
    %v1841 = vshrl.u32 %v1840, 23
    %v1842 = vsub.s32 %v1841, 127
    %v1843 = vand.u32 2147483647, %v743
    %v1844 = vand.u32 %v1843, 8388607
    %v1845 = vor.u32 %v1844, 8388608
    %v1846 = vsub.s32 0, %v1845
    %v1847 = vadd.s32 %v1842, 1
    %vm1848 = vcmp.gt.s32.totalorder %v1847, 0
    %v1849 = vsel %vm1848, %v1847, 0
    %v1850 = vshrl.u32 %v1849, 5
    %v1851 = vand.u32 %v1849, 31
    %v1852 = vsub.s32 32, %v1851
    %v1853 = vshrl.u32 683565275, %v1852
    %v1854 = vshll.u32 683565275, %v1851
    %v1855 = vshrl.u32 2475754826, %v1852
    %v1856 = vor.u32 %v1854, %v1855
    %v1857 = vshll.u32 2475754826, %v1851
    %v1858 = vshrl.u32 2131351028, %v1852
    %v1859 = vor.u32 %v1857, %v1858
    %v1860 = vshll.u32 2131351028, %v1851
    %v1861 = vshrl.u32 2102212464, %v1852
    %v1862 = vor.u32 %v1860, %v1861
    %v1863 = vshll.u32 2102212464, %v1851
    %v1864 = vshrl.u32 920167782, %v1852
    %v1865 = vor.u32 %v1863, %v1864
    %v1866 = vshll.u32 920167782, %v1851
    %v1867 = vshrl.u32 1326507024, %v1852
    %v1868 = vor.u32 %v1866, %v1867
    %vm1869 = vcmp.lt.s32.totalorder %v1850, 1
    %vm1870 = vcmp.lt.s32.totalorder %v1850, 2
    %vm1871 = vcmp.lt.s32.totalorder %v1850, 3
    %vm1872 = vcmp.lt.s32.totalorder %v1850, 4
    %v1873 = vsel %vm1869, %v1853, %v1856
    %v1874 = vsel %vm1872, %v1862, 2102212464
    %v1875 = vsel %vm1871, %v1859, %v1874
    %v1876 = vsel %vm1870, %v1873, %v1875
    %v1877 = vsel %vm1869, %v1856, %v1859
    %v1878 = vsel %vm1872, %v1865, 920167782
    %v1879 = vsel %vm1871, %v1862, %v1878
    %v1880 = vsel %vm1870, %v1877, %v1879
    %v1881 = vsel %vm1869, %v1859, %v1862
    %v1882 = vsel %vm1872, %v1868, 1326507024
    %v1883 = vsel %vm1871, %v1865, %v1882
    %v1884 = vsel %vm1870, %v1881, %v1883
    %v1885 = vshll.u32 %v1845, 8
    %v1886 = vand.u32 %v1885, 65535
    %v1887 = vshrl.u32 %v1885, 16
    %v1888 = vand.u32 %v1884, 65535
    %v1889 = vshrl.u32 %v1884, 16
    %v1890 = vmul.u32 %v1886, %v1888
    %v1891 = vmul.u32 %v1886, %v1889
    %v1892 = vmul.u32 %v1887, %v1888
    %v1893 = vmul.u32 %v1887, %v1889
    %v1894 = vshll.u32 %v1891, 16
    %v1895 = vshrl.u32 %v1891, 16
    %v1896 = vshll.u32 %v1892, 16
    %v1897 = vshrl.u32 %v1892, 16
    %vm1898 = vc.u32 %v1890, %v1894
    %v1899 = vsel %vm1898, 1, 0
    %v1900 = vadd.s32 %v1890, %v1894
    %v1901 = vadd.s32 %v1893, %v1899
    %vm1902 = vc.u32 %v1900, %v1896
    %v1903 = vsel %vm1902, 1, 0
    %v1904 = vadd.s32 %v1900, %v1896
    %v1905 = vadd.s32 %v1901, %v1903
    %v1906 = vadd.s32 %v1905, %v1895
    %v1907 = vadd.s32 %v1906, %v1897
    %v1908 = vand.u32 %v1885, 65535
    %v1909 = vshrl.u32 %v1885, 16
    %v1910 = vand.u32 %v1880, 65535
    %v1911 = vshrl.u32 %v1880, 16
    %v1912 = vmul.u32 %v1908, %v1910
    %v1913 = vmul.u32 %v1908, %v1911
    %v1914 = vmul.u32 %v1909, %v1910
    %v1915 = vmul.u32 %v1909, %v1911
    %v1916 = vshll.u32 %v1913, 16
    %v1917 = vshrl.u32 %v1913, 16
    %v1918 = vshll.u32 %v1914, 16
    %v1919 = vshrl.u32 %v1914, 16
    %vm1920 = vc.u32 %v1912, %v1916
    %v1921 = vsel %vm1920, 1, 0
    %v1922 = vadd.s32 %v1912, %v1916
    %v1923 = vadd.s32 %v1915, %v1921
    %vm1924 = vc.u32 %v1922, %v1918
    %v1925 = vsel %vm1924, 1, 0
    %v1926 = vadd.s32 %v1922, %v1918
    %v1927 = vadd.s32 %v1923, %v1925
    %v1928 = vadd.s32 %v1927, %v1917
    %v1929 = vadd.s32 %v1928, %v1919
    %v1930 = vmul.u32 %v1885, %v1876
    %v1931 = vadd.s32 %v1907, %v1926
    %vm1932 = vc.u32 %v1907, %v1926
    %v1933 = vadd.s32 %v1929, 1
    %v1934 = vsel %vm1932, %v1933, %v1929
    %v1935 = vadd.s32 %v1930, %v1934
    %v1936 = vadd.s32 %v1935, 536870912
    %v1937 = vshrl.u32 %v1936, 30
    %v1938 = vshll.u32 %v1937, 30
    %v1939 = vsub.s32 %v1935, %v1938
    %vm1940 = vcmp.lt.s32.totalorder %v1939, 0
    %v1941 = vsub.s32 0, %v1939
    %v1942 = vsel %vm1940, %v1941, %v1939
    %v1943 = vclz %v1942
    %v1944 = vsub.s32 %v1943, 2
    %vm1945 = vcmp.gt.s32.totalorder 0, %v1944
    %v1946 = vsel %vm1945, 0, %v1944
    %v1947 = vsub.s32 32, %v1946
    %v1948 = vshll.u32 %v1939, %v1946
    %v1949 = vshrl.u32 %v1931, %v1947
    %v1950 = vor.u32 %v1948, %v1949
    %v1951 = vsub.s32 4294967266, %v1946
    %v1952 = vadd.s32 %v1951, 127
    %v1953 = vshll.u32 %v1952, 23
    %v1954 = vor.u32 4788187, %v1953
    %v1955 = vand.u32 2147483647, %v1954
    %v1957 = vcvt.s32.f32 %v1950
    %v1958 = vmul.f32 %v1957, %v1955
    %v1959 = vxor.u32 %v1958, 2147483648
    %v1960 = vsel %vm1839, %v1959, %v1958
    %v1961 = vsub.s32 4, %v1937
    %v1962 = vsel %vm1839, %v1961, %v1937
    %v1963 = vsel %vm1838, %v743, %v1960
    %v1964 = vsel %vm1838, 0, %v1962
    %v1965 = vmul.f32 %v1963, %v1963
    %v1966 = vmul.f32 %v1965, -0.001358992
    %v1967 = vadd.f32 %v1966, 0.041655596
    %v1968 = vmul.f32 %v1965, %v1967
    %v1969 = vadd.f32 %v1968, -0.4999988
    %v1970 = vmul.f32 %v1965, %v1969
    %v1971 = vadd.f32 1.0, %v1970
    %v1972 = vmul.f32 %v1963, %v1963
    %v1973 = vmul.f32 %v1972, -0.00019511016
    %v1974 = vadd.f32 %v1973, 0.008332121
    %v1975 = vmul.f32 %v1972, %v1974
    %v1976 = vadd.f32 %v1975, -0.16666654
    %v1977 = vmul.f32 %v1972, %v1976
    %v1978 = vadd.f32 %v1977, 1.0
    %v1979 = vmul.f32 %v1978, %v1963
    %vm1980 = vweird.f32 %v743
    %v1981 = vadd.s32 %v1964, 3
    %v1982 = vand.u32 %v1981, 3
    %vm1983 = vcmp.lt.s32.totalorder %v1982, 2
    %vm1984 = vcmp.eq.s32.totalorder %v1982, 0
    %v1985 = vxor.u32 %v1979, 2147483648
    %v1986 = vsel %vm1984, %v1971, %v1985
    %vm1987 = vcmp.eq.s32.totalorder %v1982, 2
    %v1988 = vxor.u32 %v1971, 2147483648
    %v1989 = vsel %vm1987, %v1988, %v1979
    %v1990 = vsel %vm1983, %v1986, %v1989
    %v1991 = vsel %vm1980, nan, %v1990
    %v1992 = vand.u32 2147483647, %v744
    %vm1993 = vcmp.le.f32.partialorder %v1992, 0.7853982
    %vm1994 = vcmp.lt.s32.totalorder %v744, 0
    %v1995 = vand.u32 %v744, 2139095040
    %v1996 = vshrl.u32 %v1995, 23
    %v1997 = vsub.s32 %v1996, 127
    %v1998 = vand.u32 2147483647, %v744
    %v1999 = vand.u32 %v1998, 8388607
    %v2000 = vor.u32 %v1999, 8388608
    %v2001 = vsub.s32 0, %v2000
    %v2002 = vadd.s32 %v1997, 1
    %vm2003 = vcmp.gt.s32.totalorder %v2002, 0
    %v2004 = vsel %vm2003, %v2002, 0
    %v2005 = vshrl.u32 %v2004, 5
    %v2006 = vand.u32 %v2004, 31
    %v2007 = vsub.s32 32, %v2006
    %v2008 = vshrl.u32 683565275, %v2007
    %v2009 = vshll.u32 683565275, %v2006
    %v2010 = vshrl.u32 2475754826, %v2007
    %v2011 = vor.u32 %v2009, %v2010
    %v2012 = vshll.u32 2475754826, %v2006
    %v2013 = vshrl.u32 2131351028, %v2007
    %v2014 = vor.u32 %v2012, %v2013
    %v2015 = vshll.u32 2131351028, %v2006
    %v2016 = vshrl.u32 2102212464, %v2007
    %v2017 = vor.u32 %v2015, %v2016
    %v2018 = vshll.u32 2102212464, %v2006
    %v2019 = vshrl.u32 920167782, %v2007
    %v2020 = vor.u32 %v2018, %v2019
    %v2021 = vshll.u32 920167782, %v2006
    %v2022 = vshrl.u32 1326507024, %v2007
    %v2023 = vor.u32 %v2021, %v2022
    %vm2024 = vcmp.lt.s32.totalorder %v2005, 1
    %vm2025 = vcmp.lt.s32.totalorder %v2005, 2
    %vm2026 = vcmp.lt.s32.totalorder %v2005, 3
    %vm2027 = vcmp.lt.s32.totalorder %v2005, 4
    %v2028 = vsel %vm2024, %v2008, %v2011
    %v2029 = vsel %vm2027, %v2017, 2102212464
    %v2030 = vsel %vm2026, %v2014, %v2029
    %v2031 = vsel %vm2025, %v2028, %v2030
    %v2032 = vsel %vm2024, %v2011, %v2014
    %v2033 = vsel %vm2027, %v2020, 920167782
    %v2034 = vsel %vm2026, %v2017, %v2033
    %v2035 = vsel %vm2025, %v2032, %v2034
    %v2036 = vsel %vm2024, %v2014, %v2017
    %v2037 = vsel %vm2027, %v2023, 1326507024
    %v2038 = vsel %vm2026, %v2020, %v2037
    %v2039 = vsel %vm2025, %v2036, %v2038
    %v2040 = vshll.u32 %v2000, 8
    %v2041 = vand.u32 %v2040, 65535
    %v2042 = vshrl.u32 %v2040, 16
    %v2043 = vand.u32 %v2039, 65535
    %v2044 = vshrl.u32 %v2039, 16
    %v2045 = vmul.u32 %v2041, %v2043
    %v2046 = vmul.u32 %v2041, %v2044
    %v2047 = vmul.u32 %v2042, %v2043
    %v2048 = vmul.u32 %v2042, %v2044
    %v2049 = vshll.u32 %v2046, 16
    %v2050 = vshrl.u32 %v2046, 16
    %v2051 = vshll.u32 %v2047, 16
    %v2052 = vshrl.u32 %v2047, 16
    %vm2053 = vc.u32 %v2045, %v2049
    %v2054 = vsel %vm2053, 1, 0
    %v2055 = vadd.s32 %v2045, %v2049
    %v2056 = vadd.s32 %v2048, %v2054
    %vm2057 = vc.u32 %v2055, %v2051
    %v2058 = vsel %vm2057, 1, 0
    %v2059 = vadd.s32 %v2055, %v2051
    %v2060 = vadd.s32 %v2056, %v2058
    %v2061 = vadd.s32 %v2060, %v2050
    %v2062 = vadd.s32 %v2061, %v2052
    %v2063 = vand.u32 %v2040, 65535
    %v2064 = vshrl.u32 %v2040, 16
    %v2065 = vand.u32 %v2035, 65535
    %v2066 = vshrl.u32 %v2035, 16
    %v2067 = vmul.u32 %v2063, %v2065
    %v2068 = vmul.u32 %v2063, %v2066
    %v2069 = vmul.u32 %v2064, %v2065
    %v2070 = vmul.u32 %v2064, %v2066
    %v2071 = vshll.u32 %v2068, 16
    %v2072 = vshrl.u32 %v2068, 16
    %v2073 = vshll.u32 %v2069, 16
    %v2074 = vshrl.u32 %v2069, 16
    %vm2075 = vc.u32 %v2067, %v2071
    %v2076 = vsel %vm2075, 1, 0
    %v2077 = vadd.s32 %v2067, %v2071
    %v2078 = vadd.s32 %v2070, %v2076
    %vm2079 = vc.u32 %v2077, %v2073
    %v2080 = vsel %vm2079, 1, 0
    %v2081 = vadd.s32 %v2077, %v2073
    %v2082 = vadd.s32 %v2078, %v2080
    %v2083 = vadd.s32 %v2082, %v2072
    %v2084 = vadd.s32 %v2083, %v2074
    %v2085 = vmul.u32 %v2040, %v2031
    %v2086 = vadd.s32 %v2062, %v2081
    %vm2087 = vc.u32 %v2062, %v2081
    %v2088 = vadd.s32 %v2084, 1
    %v2089 = vsel %vm2087, %v2088, %v2084
    %v2090 = vadd.s32 %v2085, %v2089
    %v2091 = vadd.s32 %v2090, 536870912
    %v2092 = vshrl.u32 %v2091, 30
    %v2093 = vshll.u32 %v2092, 30
    %v2094 = vsub.s32 %v2090, %v2093
    %vm2095 = vcmp.lt.s32.totalorder %v2094, 0
    %v2096 = vsub.s32 0, %v2094
    %v2097 = vsel %vm2095, %v2096, %v2094
    %v2098 = vclz %v2097
    %v2099 = vsub.s32 %v2098, 2
    %vm2100 = vcmp.gt.s32.totalorder 0, %v2099
    %v2101 = vsel %vm2100, 0, %v2099
    %v2102 = vsub.s32 32, %v2101
    %v2103 = vshll.u32 %v2094, %v2101
    %v2104 = vshrl.u32 %v2086, %v2102
    %v2105 = vor.u32 %v2103, %v2104
    %v2106 = vsub.s32 4294967266, %v2101
    %v2107 = vadd.s32 %v2106, 127
    %v2108 = vshll.u32 %v2107, 23
    %v2109 = vor.u32 4788187, %v2108
    %v2110 = vand.u32 2147483647, %v2109
    %v2112 = vcvt.s32.f32 %v2105
    %v2113 = vmul.f32 %v2112, %v2110
    %v2114 = vxor.u32 %v2113, 2147483648
    %v2115 = vsel %vm1994, %v2114, %v2113
    %v2116 = vsub.s32 4, %v2092
    %v2117 = vsel %vm1994, %v2116, %v2092
    %v2118 = vsel %vm1993, %v744, %v2115
    %v2119 = vsel %vm1993, 0, %v2117
    %v2120 = vmul.f32 %v2118, %v2118
    %v2121 = vmul.f32 %v2120, -0.001358992
    %v2122 = vadd.f32 %v2121, 0.041655596
    %v2123 = vmul.f32 %v2120, %v2122
    %v2124 = vadd.f32 %v2123, -0.4999988
    %v2125 = vmul.f32 %v2120, %v2124
    %v2126 = vadd.f32 1.0, %v2125
    %v2127 = vmul.f32 %v2118, %v2118
    %v2128 = vmul.f32 %v2127, -0.00019511016
    %v2129 = vadd.f32 %v2128, 0.008332121
    %v2130 = vmul.f32 %v2127, %v2129
    %v2131 = vadd.f32 %v2130, -0.16666654
    %v2132 = vmul.f32 %v2127, %v2131
    %v2133 = vadd.f32 %v2132, 1.0
    %v2134 = vmul.f32 %v2133, %v2118
    %vm2135 = vweird.f32 %v744
    %v2136 = vadd.s32 %v2119, 3
    %v2137 = vand.u32 %v2136, 3
    %vm2138 = vcmp.lt.s32.totalorder %v2137, 2
    %vm2139 = vcmp.eq.s32.totalorder %v2137, 0
    %v2140 = vxor.u32 %v2134, 2147483648
    %v2141 = vsel %vm2139, %v2126, %v2140
    %vm2142 = vcmp.eq.s32.totalorder %v2137, 2
    %v2143 = vxor.u32 %v2126, 2147483648
    %v2144 = vsel %vm2142, %v2143, %v2134
    %v2145 = vsel %vm2138, %v2141, %v2144
    %v2146 = vsel %vm2135, nan, %v2145
    %v2147 = vand.u32 2147483647, %v745
    %vm2148 = vcmp.le.f32.partialorder %v2147, 0.7853982
    %vm2149 = vcmp.lt.s32.totalorder %v745, 0
    %v2150 = vand.u32 %v745, 2139095040
    %v2151 = vshrl.u32 %v2150, 23
    %v2152 = vsub.s32 %v2151, 127
    %v2153 = vand.u32 2147483647, %v745
    %v2154 = vand.u32 %v2153, 8388607
    %v2155 = vor.u32 %v2154, 8388608
    %v2156 = vsub.s32 0, %v2155
    %v2157 = vadd.s32 %v2152, 1
    %vm2158 = vcmp.gt.s32.totalorder %v2157, 0
    %v2159 = vsel %vm2158, %v2157, 0
    %v2160 = vshrl.u32 %v2159, 5
    %v2161 = vand.u32 %v2159, 31
    %v2162 = vsub.s32 32, %v2161
    %v2163 = vshrl.u32 683565275, %v2162
    %v2164 = vshll.u32 683565275, %v2161
    %v2165 = vshrl.u32 2475754826, %v2162
    %v2166 = vor.u32 %v2164, %v2165
    %v2167 = vshll.u32 2475754826, %v2161
    %v2168 = vshrl.u32 2131351028, %v2162
    %v2169 = vor.u32 %v2167, %v2168
    %v2170 = vshll.u32 2131351028, %v2161
    %v2171 = vshrl.u32 2102212464, %v2162
    %v2172 = vor.u32 %v2170, %v2171
    %v2173 = vshll.u32 2102212464, %v2161
    %v2174 = vshrl.u32 920167782, %v2162
    %v2175 = vor.u32 %v2173, %v2174
    %v2176 = vshll.u32 920167782, %v2161
    %v2177 = vshrl.u32 1326507024, %v2162
    %v2178 = vor.u32 %v2176, %v2177
    %vm2179 = vcmp.lt.s32.totalorder %v2160, 1
    %vm2180 = vcmp.lt.s32.totalorder %v2160, 2
    %vm2181 = vcmp.lt.s32.totalorder %v2160, 3
    %vm2182 = vcmp.lt.s32.totalorder %v2160, 4
    %v2183 = vsel %vm2179, %v2163, %v2166
    %v2184 = vsel %vm2182, %v2172, 2102212464
    %v2185 = vsel %vm2181, %v2169, %v2184
    %v2186 = vsel %vm2180, %v2183, %v2185
    %v2187 = vsel %vm2179, %v2166, %v2169
    %v2188 = vsel %vm2182, %v2175, 920167782
    %v2189 = vsel %vm2181, %v2172, %v2188
    %v2190 = vsel %vm2180, %v2187, %v2189
    %v2191 = vsel %vm2179, %v2169, %v2172
    %v2192 = vsel %vm2182, %v2178, 1326507024
    %v2193 = vsel %vm2181, %v2175, %v2192
    %v2194 = vsel %vm2180, %v2191, %v2193
    %v2195 = vshll.u32 %v2155, 8
    %v2196 = vand.u32 %v2195, 65535
    %v2197 = vshrl.u32 %v2195, 16
    %v2198 = vand.u32 %v2194, 65535
    %v2199 = vshrl.u32 %v2194, 16
    %v2200 = vmul.u32 %v2196, %v2198
    %v2201 = vmul.u32 %v2196, %v2199
    %v2202 = vmul.u32 %v2197, %v2198
    %v2203 = vmul.u32 %v2197, %v2199
    %v2204 = vshll.u32 %v2201, 16
    %v2205 = vshrl.u32 %v2201, 16
    %v2206 = vshll.u32 %v2202, 16
    %v2207 = vshrl.u32 %v2202, 16
    %vm2208 = vc.u32 %v2200, %v2204
    %v2209 = vsel %vm2208, 1, 0
    %v2210 = vadd.s32 %v2200, %v2204
    %v2211 = vadd.s32 %v2203, %v2209
    %vm2212 = vc.u32 %v2210, %v2206
    %v2213 = vsel %vm2212, 1, 0
    %v2214 = vadd.s32 %v2210, %v2206
    %v2215 = vadd.s32 %v2211, %v2213
    %v2216 = vadd.s32 %v2215, %v2205
    %v2217 = vadd.s32 %v2216, %v2207
    %v2218 = vand.u32 %v2195, 65535
    %v2219 = vshrl.u32 %v2195, 16
    %v2220 = vand.u32 %v2190, 65535
    %v2221 = vshrl.u32 %v2190, 16
    %v2222 = vmul.u32 %v2218, %v2220
    %v2223 = vmul.u32 %v2218, %v2221
    %v2224 = vmul.u32 %v2219, %v2220
    %v2225 = vmul.u32 %v2219, %v2221
    %v2226 = vshll.u32 %v2223, 16
    %v2227 = vshrl.u32 %v2223, 16
    %v2228 = vshll.u32 %v2224, 16
    %v2229 = vshrl.u32 %v2224, 16
    %vm2230 = vc.u32 %v2222, %v2226
    %v2231 = vsel %vm2230, 1, 0
    %v2232 = vadd.s32 %v2222, %v2226
    %v2233 = vadd.s32 %v2225, %v2231
    %vm2234 = vc.u32 %v2232, %v2228
    %v2235 = vsel %vm2234, 1, 0
    %v2236 = vadd.s32 %v2232, %v2228
    %v2237 = vadd.s32 %v2233, %v2235
    %v2238 = vadd.s32 %v2237, %v2227
    %v2239 = vadd.s32 %v2238, %v2229
    %v2240 = vmul.u32 %v2195, %v2186
    %v2241 = vadd.s32 %v2217, %v2236
    %vm2242 = vc.u32 %v2217, %v2236
    %v2243 = vadd.s32 %v2239, 1
    %v2244 = vsel %vm2242, %v2243, %v2239
    %v2245 = vadd.s32 %v2240, %v2244
    %v2246 = vadd.s32 %v2245, 536870912
    %v2247 = vshrl.u32 %v2246, 30
    %v2248 = vshll.u32 %v2247, 30
    %v2249 = vsub.s32 %v2245, %v2248
    %vm2250 = vcmp.lt.s32.totalorder %v2249, 0
    %v2251 = vsub.s32 0, %v2249
    %v2252 = vsel %vm2250, %v2251, %v2249
    %v2253 = vclz %v2252
    %v2254 = vsub.s32 %v2253, 2
    %vm2255 = vcmp.gt.s32.totalorder 0, %v2254
    %v2256 = vsel %vm2255, 0, %v2254
    %v2257 = vsub.s32 32, %v2256
    %v2258 = vshll.u32 %v2249, %v2256
    %v2259 = vshrl.u32 %v2241, %v2257
    %v2260 = vor.u32 %v2258, %v2259
    %v2261 = vsub.s32 4294967266, %v2256
    %v2262 = vadd.s32 %v2261, 127
    %v2263 = vshll.u32 %v2262, 23
    %v2264 = vor.u32 4788187, %v2263
    %v2265 = vand.u32 2147483647, %v2264
    %v2267 = vcvt.s32.f32 %v2260
    %v2268 = vmul.f32 %v2267, %v2265
    %v2269 = vxor.u32 %v2268, 2147483648
    %v2270 = vsel %vm2149, %v2269, %v2268
    %v2271 = vsub.s32 4, %v2247
    %v2272 = vsel %vm2149, %v2271, %v2247
    %v2273 = vsel %vm2148, %v745, %v2270
    %v2274 = vsel %vm2148, 0, %v2272
    %v2275 = vmul.f32 %v2273, %v2273
    %v2276 = vmul.f32 %v2275, -0.001358992
    %v2277 = vadd.f32 %v2276, 0.041655596
    %v2278 = vmul.f32 %v2275, %v2277
    %v2279 = vadd.f32 %v2278, -0.4999988
    %v2280 = vmul.f32 %v2275, %v2279
    %v2281 = vadd.f32 1.0, %v2280
    %v2282 = vmul.f32 %v2273, %v2273
    %v2283 = vmul.f32 %v2282, -0.00019511016
    %v2284 = vadd.f32 %v2283, 0.008332121
    %v2285 = vmul.f32 %v2282, %v2284
    %v2286 = vadd.f32 %v2285, -0.16666654
    %v2287 = vmul.f32 %v2282, %v2286
    %v2288 = vadd.f32 %v2287, 1.0
    %v2289 = vmul.f32 %v2288, %v2273
    %vm2290 = vweird.f32 %v745
    %v2291 = vadd.s32 %v2274, 3
    %v2292 = vand.u32 %v2291, 3
    %vm2293 = vcmp.lt.s32.totalorder %v2292, 2
    %vm2294 = vcmp.eq.s32.totalorder %v2292, 0
    %v2295 = vxor.u32 %v2289, 2147483648
    %v2296 = vsel %vm2294, %v2281, %v2295
    %vm2297 = vcmp.eq.s32.totalorder %v2292, 2
    %v2298 = vxor.u32 %v2281, 2147483648
    %v2299 = vsel %vm2297, %v2298, %v2289
    %v2300 = vsel %vm2293, %v2296, %v2299
    %v2301 = vsel %vm2290, nan, %v2300
    %v2302 = vand.u32 2147483647, %v746
    %vm2303 = vcmp.le.f32.partialorder %v2302, 0.7853982
    %vm2304 = vcmp.lt.s32.totalorder %v746, 0
    %v2305 = vand.u32 %v746, 2139095040
    %v2306 = vshrl.u32 %v2305, 23
    %v2307 = vsub.s32 %v2306, 127
    %v2308 = vand.u32 2147483647, %v746
    %v2309 = vand.u32 %v2308, 8388607
    %v2310 = vor.u32 %v2309, 8388608
    %v2311 = vsub.s32 0, %v2310
    %v2312 = vadd.s32 %v2307, 1
    %vm2313 = vcmp.gt.s32.totalorder %v2312, 0
    %v2314 = vsel %vm2313, %v2312, 0
    %v2315 = vshrl.u32 %v2314, 5
    %v2316 = vand.u32 %v2314, 31
    %v2317 = vsub.s32 32, %v2316
    %v2318 = vshrl.u32 683565275, %v2317
    %v2319 = vshll.u32 683565275, %v2316
    %v2320 = vshrl.u32 2475754826, %v2317
    %v2321 = vor.u32 %v2319, %v2320
    %v2322 = vshll.u32 2475754826, %v2316
    %v2323 = vshrl.u32 2131351028, %v2317
    %v2324 = vor.u32 %v2322, %v2323
    %v2325 = vshll.u32 2131351028, %v2316
    %v2326 = vshrl.u32 2102212464, %v2317
    %v2327 = vor.u32 %v2325, %v2326
    %v2328 = vshll.u32 2102212464, %v2316
    %v2329 = vshrl.u32 920167782, %v2317
    %v2330 = vor.u32 %v2328, %v2329
    %v2331 = vshll.u32 920167782, %v2316
    %v2332 = vshrl.u32 1326507024, %v2317
    %v2333 = vor.u32 %v2331, %v2332
    %vm2334 = vcmp.lt.s32.totalorder %v2315, 1
    %vm2335 = vcmp.lt.s32.totalorder %v2315, 2
    %vm2336 = vcmp.lt.s32.totalorder %v2315, 3
    %vm2337 = vcmp.lt.s32.totalorder %v2315, 4
    %v2338 = vsel %vm2334, %v2318, %v2321
    %v2339 = vsel %vm2337, %v2327, 2102212464
    %v2340 = vsel %vm2336, %v2324, %v2339
    %v2341 = vsel %vm2335, %v2338, %v2340
    %v2342 = vsel %vm2334, %v2321, %v2324
    %v2343 = vsel %vm2337, %v2330, 920167782
    %v2344 = vsel %vm2336, %v2327, %v2343
    %v2345 = vsel %vm2335, %v2342, %v2344
    %v2346 = vsel %vm2334, %v2324, %v2327
    %v2347 = vsel %vm2337, %v2333, 1326507024
    %v2348 = vsel %vm2336, %v2330, %v2347
    %v2349 = vsel %vm2335, %v2346, %v2348
    %v2350 = vshll.u32 %v2310, 8
    %v2351 = vand.u32 %v2350, 65535
    %v2352 = vshrl.u32 %v2350, 16
    %v2353 = vand.u32 %v2349, 65535
    %v2354 = vshrl.u32 %v2349, 16
    %v2355 = vmul.u32 %v2351, %v2353
    %v2356 = vmul.u32 %v2351, %v2354
    %v2357 = vmul.u32 %v2352, %v2353
    %v2358 = vmul.u32 %v2352, %v2354
    %v2359 = vshll.u32 %v2356, 16
    %v2360 = vshrl.u32 %v2356, 16
    %v2361 = vshll.u32 %v2357, 16
    %v2362 = vshrl.u32 %v2357, 16
    %vm2363 = vc.u32 %v2355, %v2359
    %v2364 = vsel %vm2363, 1, 0
    %v2365 = vadd.s32 %v2355, %v2359
    %v2366 = vadd.s32 %v2358, %v2364
    %vm2367 = vc.u32 %v2365, %v2361
    %v2368 = vsel %vm2367, 1, 0
    %v2369 = vadd.s32 %v2365, %v2361
    %v2370 = vadd.s32 %v2366, %v2368
    %v2371 = vadd.s32 %v2370, %v2360
    %v2372 = vadd.s32 %v2371, %v2362
    %v2373 = vand.u32 %v2350, 65535
    %v2374 = vshrl.u32 %v2350, 16
    %v2375 = vand.u32 %v2345, 65535
    %v2376 = vshrl.u32 %v2345, 16
    %v2377 = vmul.u32 %v2373, %v2375
    %v2378 = vmul.u32 %v2373, %v2376
    %v2379 = vmul.u32 %v2374, %v2375
    %v2380 = vmul.u32 %v2374, %v2376
    %v2381 = vshll.u32 %v2378, 16
    %v2382 = vshrl.u32 %v2378, 16
    %v2383 = vshll.u32 %v2379, 16
    %v2384 = vshrl.u32 %v2379, 16
    %vm2385 = vc.u32 %v2377, %v2381
    %v2386 = vsel %vm2385, 1, 0
    %v2387 = vadd.s32 %v2377, %v2381
    %v2388 = vadd.s32 %v2380, %v2386
    %vm2389 = vc.u32 %v2387, %v2383
    %v2390 = vsel %vm2389, 1, 0
    %v2391 = vadd.s32 %v2387, %v2383
    %v2392 = vadd.s32 %v2388, %v2390
    %v2393 = vadd.s32 %v2392, %v2382
    %v2394 = vadd.s32 %v2393, %v2384
    %v2395 = vmul.u32 %v2350, %v2341
    %v2396 = vadd.s32 %v2372, %v2391
    %vm2397 = vc.u32 %v2372, %v2391
    %v2398 = vadd.s32 %v2394, 1
    %v2399 = vsel %vm2397, %v2398, %v2394
    %v2400 = vadd.s32 %v2395, %v2399
    %v2401 = vadd.s32 %v2400, 536870912
    %v2402 = vshrl.u32 %v2401, 30
    %v2403 = vshll.u32 %v2402, 30
    %v2404 = vsub.s32 %v2400, %v2403
    %vm2405 = vcmp.lt.s32.totalorder %v2404, 0
    %v2406 = vsub.s32 0, %v2404
    %v2407 = vsel %vm2405, %v2406, %v2404
    %v2408 = vclz %v2407
    %v2409 = vsub.s32 %v2408, 2
    %vm2410 = vcmp.gt.s32.totalorder 0, %v2409
    %v2411 = vsel %vm2410, 0, %v2409
    %v2412 = vsub.s32 32, %v2411
    %v2413 = vshll.u32 %v2404, %v2411
    %v2414 = vshrl.u32 %v2396, %v2412
    %v2415 = vor.u32 %v2413, %v2414
    %v2416 = vsub.s32 4294967266, %v2411
    %v2417 = vadd.s32 %v2416, 127
    %v2418 = vshll.u32 %v2417, 23
    %v2419 = vor.u32 4788187, %v2418
    %v2420 = vand.u32 2147483647, %v2419
    %v2422 = vcvt.s32.f32 %v2415
    %v2423 = vmul.f32 %v2422, %v2420
    %v2424 = vxor.u32 %v2423, 2147483648
    %v2425 = vsel %vm2304, %v2424, %v2423
    %v2426 = vsub.s32 4, %v2402
    %v2427 = vsel %vm2304, %v2426, %v2402
    %v2428 = vsel %vm2303, %v746, %v2425
    %v2429 = vsel %vm2303, 0, %v2427
    %v2430 = vmul.f32 %v2428, %v2428
    %v2431 = vmul.f32 %v2430, -0.001358992
    %v2432 = vadd.f32 %v2431, 0.041655596
    %v2433 = vmul.f32 %v2430, %v2432
    %v2434 = vadd.f32 %v2433, -0.4999988
    %v2435 = vmul.f32 %v2430, %v2434
    %v2436 = vadd.f32 1.0, %v2435
    %v2437 = vmul.f32 %v2428, %v2428
    %v2438 = vmul.f32 %v2437, -0.00019511016
    %v2439 = vadd.f32 %v2438, 0.008332121
    %v2440 = vmul.f32 %v2437, %v2439
    %v2441 = vadd.f32 %v2440, -0.16666654
    %v2442 = vmul.f32 %v2437, %v2441
    %v2443 = vadd.f32 %v2442, 1.0
    %v2444 = vmul.f32 %v2443, %v2428
    %vm2445 = vweird.f32 %v746
    %v2446 = vadd.s32 %v2429, 3
    %v2447 = vand.u32 %v2446, 3
    %vm2448 = vcmp.lt.s32.totalorder %v2447, 2
    %vm2449 = vcmp.eq.s32.totalorder %v2447, 0
    %v2450 = vxor.u32 %v2444, 2147483648
    %v2451 = vsel %vm2449, %v2436, %v2450
    %vm2452 = vcmp.eq.s32.totalorder %v2447, 2
    %v2453 = vxor.u32 %v2436, 2147483648
    %v2454 = vsel %vm2452, %v2453, %v2444
    %v2455 = vsel %vm2448, %v2451, %v2454
    %v2456 = vsel %vm2445, nan, %v2455
    %v2457 = vand.u32 2147483647, %v747
    %vm2458 = vcmp.le.f32.partialorder %v2457, 0.7853982
    %vm2459 = vcmp.lt.s32.totalorder %v747, 0
    %v2460 = vand.u32 %v747, 2139095040
    %v2461 = vshrl.u32 %v2460, 23
    %v2462 = vsub.s32 %v2461, 127
    %v2463 = vand.u32 2147483647, %v747
    %v2464 = vand.u32 %v2463, 8388607
    %v2465 = vor.u32 %v2464, 8388608
    %v2466 = vsub.s32 0, %v2465
    %v2467 = vadd.s32 %v2462, 1
    %vm2468 = vcmp.gt.s32.totalorder %v2467, 0
    %v2469 = vsel %vm2468, %v2467, 0
    %v2470 = vshrl.u32 %v2469, 5
    %v2471 = vand.u32 %v2469, 31
    %v2472 = vsub.s32 32, %v2471
    %v2473 = vshrl.u32 683565275, %v2472
    %v2474 = vshll.u32 683565275, %v2471
    %v2475 = vshrl.u32 2475754826, %v2472
    %v2476 = vor.u32 %v2474, %v2475
    %v2477 = vshll.u32 2475754826, %v2471
    %v2478 = vshrl.u32 2131351028, %v2472
    %v2479 = vor.u32 %v2477, %v2478
    %v2480 = vshll.u32 2131351028, %v2471
    %v2481 = vshrl.u32 2102212464, %v2472
    %v2482 = vor.u32 %v2480, %v2481
    %v2483 = vshll.u32 2102212464, %v2471
    %v2484 = vshrl.u32 920167782, %v2472
    %v2485 = vor.u32 %v2483, %v2484
    %v2486 = vshll.u32 920167782, %v2471
    %v2487 = vshrl.u32 1326507024, %v2472
    %v2488 = vor.u32 %v2486, %v2487
    %vm2489 = vcmp.lt.s32.totalorder %v2470, 1
    %vm2490 = vcmp.lt.s32.totalorder %v2470, 2
    %vm2491 = vcmp.lt.s32.totalorder %v2470, 3
    %vm2492 = vcmp.lt.s32.totalorder %v2470, 4
    %v2493 = vsel %vm2489, %v2473, %v2476
    %v2494 = vsel %vm2492, %v2482, 2102212464
    %v2495 = vsel %vm2491, %v2479, %v2494
    %v2496 = vsel %vm2490, %v2493, %v2495
    %v2497 = vsel %vm2489, %v2476, %v2479
    %v2498 = vsel %vm2492, %v2485, 920167782
    %v2499 = vsel %vm2491, %v2482, %v2498
    %v2500 = vsel %vm2490, %v2497, %v2499
    %v2501 = vsel %vm2489, %v2479, %v2482
    %v2502 = vsel %vm2492, %v2488, 1326507024
    %v2503 = vsel %vm2491, %v2485, %v2502
    %v2504 = vsel %vm2490, %v2501, %v2503
    %v2505 = vshll.u32 %v2465, 8
    %v2506 = vand.u32 %v2505, 65535
    %v2507 = vshrl.u32 %v2505, 16
    %v2508 = vand.u32 %v2504, 65535
    %v2509 = vshrl.u32 %v2504, 16
    %v2510 = vmul.u32 %v2506, %v2508
    %v2511 = vmul.u32 %v2506, %v2509
    %v2512 = vmul.u32 %v2507, %v2508
    %v2513 = vmul.u32 %v2507, %v2509
    %v2514 = vshll.u32 %v2511, 16
    %v2515 = vshrl.u32 %v2511, 16
    %v2516 = vshll.u32 %v2512, 16
    %v2517 = vshrl.u32 %v2512, 16
    %vm2518 = vc.u32 %v2510, %v2514
    %v2519 = vsel %vm2518, 1, 0
    %v2520 = vadd.s32 %v2510, %v2514
    %v2521 = vadd.s32 %v2513, %v2519
    %vm2522 = vc.u32 %v2520, %v2516
    %v2523 = vsel %vm2522, 1, 0
    %v2524 = vadd.s32 %v2520, %v2516
    %v2525 = vadd.s32 %v2521, %v2523
    %v2526 = vadd.s32 %v2525, %v2515
    %v2527 = vadd.s32 %v2526, %v2517
    %v2528 = vand.u32 %v2505, 65535
    %v2529 = vshrl.u32 %v2505, 16
    %v2530 = vand.u32 %v2500, 65535
    %v2531 = vshrl.u32 %v2500, 16
    %v2532 = vmul.u32 %v2528, %v2530
    %v2533 = vmul.u32 %v2528, %v2531
    %v2534 = vmul.u32 %v2529, %v2530
    %v2535 = vmul.u32 %v2529, %v2531
    %v2536 = vshll.u32 %v2533, 16
    %v2537 = vshrl.u32 %v2533, 16
    %v2538 = vshll.u32 %v2534, 16
    %v2539 = vshrl.u32 %v2534, 16
    %vm2540 = vc.u32 %v2532, %v2536
    %v2541 = vsel %vm2540, 1, 0
    %v2542 = vadd.s32 %v2532, %v2536
    %v2543 = vadd.s32 %v2535, %v2541
    %vm2544 = vc.u32 %v2542, %v2538
    %v2545 = vsel %vm2544, 1, 0
    %v2546 = vadd.s32 %v2542, %v2538
    %v2547 = vadd.s32 %v2543, %v2545
    %v2548 = vadd.s32 %v2547, %v2537
    %v2549 = vadd.s32 %v2548, %v2539
    %v2550 = vmul.u32 %v2505, %v2496
    %v2551 = vadd.s32 %v2527, %v2546
    %vm2552 = vc.u32 %v2527, %v2546
    %v2553 = vadd.s32 %v2549, 1
    %v2554 = vsel %vm2552, %v2553, %v2549
    %v2555 = vadd.s32 %v2550, %v2554
    %v2556 = vadd.s32 %v2555, 536870912
    %v2557 = vshrl.u32 %v2556, 30
    %v2558 = vshll.u32 %v2557, 30
    %v2559 = vsub.s32 %v2555, %v2558
    %vm2560 = vcmp.lt.s32.totalorder %v2559, 0
    %v2561 = vsub.s32 0, %v2559
    %v2562 = vsel %vm2560, %v2561, %v2559
    %v2563 = vclz %v2562
    %v2564 = vsub.s32 %v2563, 2
    %vm2565 = vcmp.gt.s32.totalorder 0, %v2564
    %v2566 = vsel %vm2565, 0, %v2564
    %v2567 = vsub.s32 32, %v2566
    %v2568 = vshll.u32 %v2559, %v2566
    %v2569 = vshrl.u32 %v2551, %v2567
    %v2570 = vor.u32 %v2568, %v2569
    %v2571 = vsub.s32 4294967266, %v2566
    %v2572 = vadd.s32 %v2571, 127
    %v2573 = vshll.u32 %v2572, 23
    %v2574 = vor.u32 4788187, %v2573
    %v2575 = vand.u32 2147483647, %v2574
    %v2577 = vcvt.s32.f32 %v2570
    %v2578 = vmul.f32 %v2577, %v2575
    %v2579 = vxor.u32 %v2578, 2147483648
    %v2580 = vsel %vm2459, %v2579, %v2578
    %v2581 = vsub.s32 4, %v2557
    %v2582 = vsel %vm2459, %v2581, %v2557
    %v2583 = vsel %vm2458, %v747, %v2580
    %v2584 = vsel %vm2458, 0, %v2582
    %v2585 = vmul.f32 %v2583, %v2583
    %v2586 = vmul.f32 %v2585, -0.001358992
    %v2587 = vadd.f32 %v2586, 0.041655596
    %v2588 = vmul.f32 %v2585, %v2587
    %v2589 = vadd.f32 %v2588, -0.4999988
    %v2590 = vmul.f32 %v2585, %v2589
    %v2591 = vadd.f32 1.0, %v2590
    %v2592 = vmul.f32 %v2583, %v2583
    %v2593 = vmul.f32 %v2592, -0.00019511016
    %v2594 = vadd.f32 %v2593, 0.008332121
    %v2595 = vmul.f32 %v2592, %v2594
    %v2596 = vadd.f32 %v2595, -0.16666654
    %v2597 = vmul.f32 %v2592, %v2596
    %v2598 = vadd.f32 %v2597, 1.0
    %v2599 = vmul.f32 %v2598, %v2583
    %vm2600 = vweird.f32 %v747
    %v2601 = vadd.s32 %v2584, 3
    %v2602 = vand.u32 %v2601, 3
    %vm2603 = vcmp.lt.s32.totalorder %v2602, 2
    %vm2604 = vcmp.eq.s32.totalorder %v2602, 0
    %v2605 = vxor.u32 %v2599, 2147483648
    %v2606 = vsel %vm2604, %v2591, %v2605
    %vm2607 = vcmp.eq.s32.totalorder %v2602, 2
    %v2608 = vxor.u32 %v2591, 2147483648
    %v2609 = vsel %vm2607, %v2608, %v2599
    %v2610 = vsel %vm2603, %v2606, %v2609
    %v2611 = vsel %vm2600, nan, %v2610
    %v2612 = vand.u32 2147483647, %v748
    %vm2613 = vcmp.le.f32.partialorder %v2612, 0.7853982
    %vm2614 = vcmp.lt.s32.totalorder %v748, 0
    %v2615 = vand.u32 %v748, 2139095040
    %v2616 = vshrl.u32 %v2615, 23
    %v2617 = vsub.s32 %v2616, 127
    %v2618 = vand.u32 2147483647, %v748
    %v2619 = vand.u32 %v2618, 8388607
    %v2620 = vor.u32 %v2619, 8388608
    %v2621 = vsub.s32 0, %v2620
    %v2622 = vadd.s32 %v2617, 1
    %vm2623 = vcmp.gt.s32.totalorder %v2622, 0
    %v2624 = vsel %vm2623, %v2622, 0
    %v2625 = vshrl.u32 %v2624, 5
    %v2626 = vand.u32 %v2624, 31
    %v2627 = vsub.s32 32, %v2626
    %v2628 = vshrl.u32 683565275, %v2627
    %v2629 = vshll.u32 683565275, %v2626
    %v2630 = vshrl.u32 2475754826, %v2627
    %v2631 = vor.u32 %v2629, %v2630
    %v2632 = vshll.u32 2475754826, %v2626
    %v2633 = vshrl.u32 2131351028, %v2627
    %v2634 = vor.u32 %v2632, %v2633
    %v2635 = vshll.u32 2131351028, %v2626
    %v2636 = vshrl.u32 2102212464, %v2627
    %v2637 = vor.u32 %v2635, %v2636
    %v2638 = vshll.u32 2102212464, %v2626
    %v2639 = vshrl.u32 920167782, %v2627
    %v2640 = vor.u32 %v2638, %v2639
    %v2641 = vshll.u32 920167782, %v2626
    %v2642 = vshrl.u32 1326507024, %v2627
    %v2643 = vor.u32 %v2641, %v2642
    %vm2644 = vcmp.lt.s32.totalorder %v2625, 1
    %vm2645 = vcmp.lt.s32.totalorder %v2625, 2
    %vm2646 = vcmp.lt.s32.totalorder %v2625, 3
    %vm2647 = vcmp.lt.s32.totalorder %v2625, 4
    %v2648 = vsel %vm2644, %v2628, %v2631
    %v2649 = vsel %vm2647, %v2637, 2102212464
    %v2650 = vsel %vm2646, %v2634, %v2649
    %v2651 = vsel %vm2645, %v2648, %v2650
    %v2652 = vsel %vm2644, %v2631, %v2634
    %v2653 = vsel %vm2647, %v2640, 920167782
    %v2654 = vsel %vm2646, %v2637, %v2653
    %v2655 = vsel %vm2645, %v2652, %v2654
    %v2656 = vsel %vm2644, %v2634, %v2637
    %v2657 = vsel %vm2647, %v2643, 1326507024
    %v2658 = vsel %vm2646, %v2640, %v2657
    %v2659 = vsel %vm2645, %v2656, %v2658
    %v2660 = vshll.u32 %v2620, 8
    %v2661 = vand.u32 %v2660, 65535
    %v2662 = vshrl.u32 %v2660, 16
    %v2663 = vand.u32 %v2659, 65535
    %v2664 = vshrl.u32 %v2659, 16
    %v2665 = vmul.u32 %v2661, %v2663
    %v2666 = vmul.u32 %v2661, %v2664
    %v2667 = vmul.u32 %v2662, %v2663
    %v2668 = vmul.u32 %v2662, %v2664
    %v2669 = vshll.u32 %v2666, 16
    %v2670 = vshrl.u32 %v2666, 16
    %v2671 = vshll.u32 %v2667, 16
    %v2672 = vshrl.u32 %v2667, 16
    %vm2673 = vc.u32 %v2665, %v2669
    %v2674 = vsel %vm2673, 1, 0
    %v2675 = vadd.s32 %v2665, %v2669
    %v2676 = vadd.s32 %v2668, %v2674
    %vm2677 = vc.u32 %v2675, %v2671
    %v2678 = vsel %vm2677, 1, 0
    %v2679 = vadd.s32 %v2675, %v2671
    %v2680 = vadd.s32 %v2676, %v2678
    %v2681 = vadd.s32 %v2680, %v2670
    %v2682 = vadd.s32 %v2681, %v2672
    %v2683 = vand.u32 %v2660, 65535
    %v2684 = vshrl.u32 %v2660, 16
    %v2685 = vand.u32 %v2655, 65535
    %v2686 = vshrl.u32 %v2655, 16
    %v2687 = vmul.u32 %v2683, %v2685
    %v2688 = vmul.u32 %v2683, %v2686
    %v2689 = vmul.u32 %v2684, %v2685
    %v2690 = vmul.u32 %v2684, %v2686
    %v2691 = vshll.u32 %v2688, 16
    %v2692 = vshrl.u32 %v2688, 16
    %v2693 = vshll.u32 %v2689, 16
    %v2694 = vshrl.u32 %v2689, 16
    %vm2695 = vc.u32 %v2687, %v2691
    %v2696 = vsel %vm2695, 1, 0
    %v2697 = vadd.s32 %v2687, %v2691
    %v2698 = vadd.s32 %v2690, %v2696
    %vm2699 = vc.u32 %v2697, %v2693
    %v2700 = vsel %vm2699, 1, 0
    %v2701 = vadd.s32 %v2697, %v2693
    %v2702 = vadd.s32 %v2698, %v2700
    %v2703 = vadd.s32 %v2702, %v2692
    %v2704 = vadd.s32 %v2703, %v2694
    %v2705 = vmul.u32 %v2660, %v2651
    %v2706 = vadd.s32 %v2682, %v2701
    %vm2707 = vc.u32 %v2682, %v2701
    %v2708 = vadd.s32 %v2704, 1
    %v2709 = vsel %vm2707, %v2708, %v2704
    %v2710 = vadd.s32 %v2705, %v2709
    %v2711 = vadd.s32 %v2710, 536870912
    %v2712 = vshrl.u32 %v2711, 30
    %v2713 = vshll.u32 %v2712, 30
    %v2714 = vsub.s32 %v2710, %v2713
    %vm2715 = vcmp.lt.s32.totalorder %v2714, 0
    %v2716 = vsub.s32 0, %v2714
    %v2717 = vsel %vm2715, %v2716, %v2714
    %v2718 = vclz %v2717
    %v2719 = vsub.s32 %v2718, 2
    %vm2720 = vcmp.gt.s32.totalorder 0, %v2719
    %v2721 = vsel %vm2720, 0, %v2719
    %v2722 = vsub.s32 32, %v2721
    %v2723 = vshll.u32 %v2714, %v2721
    %v2724 = vshrl.u32 %v2706, %v2722
    %v2725 = vor.u32 %v2723, %v2724
    %v2726 = vsub.s32 4294967266, %v2721
    %v2727 = vadd.s32 %v2726, 127
    %v2728 = vshll.u32 %v2727, 23
    %v2729 = vor.u32 4788187, %v2728
    %v2730 = vand.u32 2147483647, %v2729
    %v2732 = vcvt.s32.f32 %v2725
    %v2733 = vmul.f32 %v2732, %v2730
    %v2734 = vxor.u32 %v2733, 2147483648
    %v2735 = vsel %vm2614, %v2734, %v2733
    %v2736 = vsub.s32 4, %v2712
    %v2737 = vsel %vm2614, %v2736, %v2712
    %v2738 = vsel %vm2613, %v748, %v2735
    %v2739 = vsel %vm2613, 0, %v2737
    %v2740 = vmul.f32 %v2738, %v2738
    %v2741 = vmul.f32 %v2740, -0.001358992
    %v2742 = vadd.f32 %v2741, 0.041655596
    %v2743 = vmul.f32 %v2740, %v2742
    %v2744 = vadd.f32 %v2743, -0.4999988
    %v2745 = vmul.f32 %v2740, %v2744
    %v2746 = vadd.f32 1.0, %v2745
    %v2747 = vmul.f32 %v2738, %v2738
    %v2748 = vmul.f32 %v2747, -0.00019511016
    %v2749 = vadd.f32 %v2748, 0.008332121
    %v2750 = vmul.f32 %v2747, %v2749
    %v2751 = vadd.f32 %v2750, -0.16666654
    %v2752 = vmul.f32 %v2747, %v2751
    %v2753 = vadd.f32 %v2752, 1.0
    %v2754 = vmul.f32 %v2753, %v2738
    %vm2755 = vweird.f32 %v748
    %v2756 = vadd.s32 %v2739, 3
    %v2757 = vand.u32 %v2756, 3
    %vm2758 = vcmp.lt.s32.totalorder %v2757, 2
    %vm2759 = vcmp.eq.s32.totalorder %v2757, 0
    %v2760 = vxor.u32 %v2754, 2147483648
    %v2761 = vsel %vm2759, %v2746, %v2760
    %vm2762 = vcmp.eq.s32.totalorder %v2757, 2
    %v2763 = vxor.u32 %v2746, 2147483648
    %v2764 = vsel %vm2762, %v2763, %v2754
    %v2765 = vsel %vm2758, %v2761, %v2764
    %v2766 = vsel %vm2755, nan, %v2765
    %v2767 = vand.u32 2147483647, %v749
    %vm2768 = vcmp.le.f32.partialorder %v2767, 0.7853982
    %vm2769 = vcmp.lt.s32.totalorder %v749, 0
    %v2770 = vand.u32 %v749, 2139095040
    %v2771 = vshrl.u32 %v2770, 23
    %v2772 = vsub.s32 %v2771, 127
    %v2773 = vand.u32 2147483647, %v749
    %v2774 = vand.u32 %v2773, 8388607
    %v2775 = vor.u32 %v2774, 8388608
    %v2776 = vsub.s32 0, %v2775
    %v2777 = vadd.s32 %v2772, 1
    %vm2778 = vcmp.gt.s32.totalorder %v2777, 0
    %v2779 = vsel %vm2778, %v2777, 0
    %v2780 = vshrl.u32 %v2779, 5
    %v2781 = vand.u32 %v2779, 31
    %v2782 = vsub.s32 32, %v2781
    %v2783 = vshrl.u32 683565275, %v2782
    %v2784 = vshll.u32 683565275, %v2781
    %v2785 = vshrl.u32 2475754826, %v2782
    %v2786 = vor.u32 %v2784, %v2785
    %v2787 = vshll.u32 2475754826, %v2781
    %v2788 = vshrl.u32 2131351028, %v2782
    %v2789 = vor.u32 %v2787, %v2788
    %v2790 = vshll.u32 2131351028, %v2781
    %v2791 = vshrl.u32 2102212464, %v2782
    %v2792 = vor.u32 %v2790, %v2791
    %v2793 = vshll.u32 2102212464, %v2781
    %v2794 = vshrl.u32 920167782, %v2782
    %v2795 = vor.u32 %v2793, %v2794
    %v2796 = vshll.u32 920167782, %v2781
    %v2797 = vshrl.u32 1326507024, %v2782
    %v2798 = vor.u32 %v2796, %v2797
    %vm2799 = vcmp.lt.s32.totalorder %v2780, 1
    %vm2800 = vcmp.lt.s32.totalorder %v2780, 2
    %vm2801 = vcmp.lt.s32.totalorder %v2780, 3
    %vm2802 = vcmp.lt.s32.totalorder %v2780, 4
    %v2803 = vsel %vm2799, %v2783, %v2786
    %v2804 = vsel %vm2802, %v2792, 2102212464
    %v2805 = vsel %vm2801, %v2789, %v2804
    %v2806 = vsel %vm2800, %v2803, %v2805
    %v2807 = vsel %vm2799, %v2786, %v2789
    %v2808 = vsel %vm2802, %v2795, 920167782
    %v2809 = vsel %vm2801, %v2792, %v2808
    %v2810 = vsel %vm2800, %v2807, %v2809
    %v2811 = vsel %vm2799, %v2789, %v2792
    %v2812 = vsel %vm2802, %v2798, 1326507024
    %v2813 = vsel %vm2801, %v2795, %v2812
    %v2814 = vsel %vm2800, %v2811, %v2813
    %v2815 = vshll.u32 %v2775, 8
    %v2816 = vand.u32 %v2815, 65535
    %v2817 = vshrl.u32 %v2815, 16
    %v2818 = vand.u32 %v2814, 65535
    %v2819 = vshrl.u32 %v2814, 16
    %v2820 = vmul.u32 %v2816, %v2818
    %v2821 = vmul.u32 %v2816, %v2819
    %v2822 = vmul.u32 %v2817, %v2818
    %v2823 = vmul.u32 %v2817, %v2819
    %v2824 = vshll.u32 %v2821, 16
    %v2825 = vshrl.u32 %v2821, 16
    %v2826 = vshll.u32 %v2822, 16
    %v2827 = vshrl.u32 %v2822, 16
    %vm2828 = vc.u32 %v2820, %v2824
    %v2829 = vsel %vm2828, 1, 0
    %v2830 = vadd.s32 %v2820, %v2824
    %v2831 = vadd.s32 %v2823, %v2829
    %vm2832 = vc.u32 %v2830, %v2826
    %v2833 = vsel %vm2832, 1, 0
    %v2834 = vadd.s32 %v2830, %v2826
    %v2835 = vadd.s32 %v2831, %v2833
    %v2836 = vadd.s32 %v2835, %v2825
    %v2837 = vadd.s32 %v2836, %v2827
    %v2838 = vand.u32 %v2815, 65535
    %v2839 = vshrl.u32 %v2815, 16
    %v2840 = vand.u32 %v2810, 65535
    %v2841 = vshrl.u32 %v2810, 16
    %v2842 = vmul.u32 %v2838, %v2840
    %v2843 = vmul.u32 %v2838, %v2841
    %v2844 = vmul.u32 %v2839, %v2840
    %v2845 = vmul.u32 %v2839, %v2841
    %v2846 = vshll.u32 %v2843, 16
    %v2847 = vshrl.u32 %v2843, 16
    %v2848 = vshll.u32 %v2844, 16
    %v2849 = vshrl.u32 %v2844, 16
    %vm2850 = vc.u32 %v2842, %v2846
    %v2851 = vsel %vm2850, 1, 0
    %v2852 = vadd.s32 %v2842, %v2846
    %v2853 = vadd.s32 %v2845, %v2851
    %vm2854 = vc.u32 %v2852, %v2848
    %v2855 = vsel %vm2854, 1, 0
    %v2856 = vadd.s32 %v2852, %v2848
    %v2857 = vadd.s32 %v2853, %v2855
    %v2858 = vadd.s32 %v2857, %v2847
    %v2859 = vadd.s32 %v2858, %v2849
    %v2860 = vmul.u32 %v2815, %v2806
    %v2861 = vadd.s32 %v2837, %v2856
    %vm2862 = vc.u32 %v2837, %v2856
    %v2863 = vadd.s32 %v2859, 1
    %v2864 = vsel %vm2862, %v2863, %v2859
    %v2865 = vadd.s32 %v2860, %v2864
    %v2866 = vadd.s32 %v2865, 536870912
    %v2867 = vshrl.u32 %v2866, 30
    %v2868 = vshll.u32 %v2867, 30
    %v2869 = vsub.s32 %v2865, %v2868
    %vm2870 = vcmp.lt.s32.totalorder %v2869, 0
    %v2871 = vsub.s32 0, %v2869
    %v2872 = vsel %vm2870, %v2871, %v2869
    %v2873 = vclz %v2872
    %v2874 = vsub.s32 %v2873, 2
    %vm2875 = vcmp.gt.s32.totalorder 0, %v2874
    %v2876 = vsel %vm2875, 0, %v2874
    %v2877 = vsub.s32 32, %v2876
    %v2878 = vshll.u32 %v2869, %v2876
    %v2879 = vshrl.u32 %v2861, %v2877
    %v2880 = vor.u32 %v2878, %v2879
    %v2881 = vsub.s32 4294967266, %v2876
    %v2882 = vadd.s32 %v2881, 127
    %v2883 = vshll.u32 %v2882, 23
    %v2884 = vor.u32 4788187, %v2883
    %v2885 = vand.u32 2147483647, %v2884
    %v2887 = vcvt.s32.f32 %v2880
    %v2888 = vmul.f32 %v2887, %v2885
    %v2889 = vxor.u32 %v2888, 2147483648
    %v2890 = vsel %vm2769, %v2889, %v2888
    %v2891 = vsub.s32 4, %v2867
    %v2892 = vsel %vm2769, %v2891, %v2867
    %v2893 = vsel %vm2768, %v749, %v2890
    %v2894 = vsel %vm2768, 0, %v2892
    %v2895 = vmul.f32 %v2893, %v2893
    %v2896 = vmul.f32 %v2895, -0.001358992
    %v2897 = vadd.f32 %v2896, 0.041655596
    %v2898 = vmul.f32 %v2895, %v2897
    %v2899 = vadd.f32 %v2898, -0.4999988
    %v2900 = vmul.f32 %v2895, %v2899
    %v2901 = vadd.f32 1.0, %v2900
    %v2902 = vmul.f32 %v2893, %v2893
    %v2903 = vmul.f32 %v2902, -0.00019511016
    %v2904 = vadd.f32 %v2903, 0.008332121
    %v2905 = vmul.f32 %v2902, %v2904
    %v2906 = vadd.f32 %v2905, -0.16666654
    %v2907 = vmul.f32 %v2902, %v2906
    %v2908 = vadd.f32 %v2907, 1.0
    %v2909 = vmul.f32 %v2908, %v2893
    %vm2910 = vweird.f32 %v749
    %v2911 = vadd.s32 %v2894, 3
    %v2912 = vand.u32 %v2911, 3
    %vm2913 = vcmp.lt.s32.totalorder %v2912, 2
    %vm2914 = vcmp.eq.s32.totalorder %v2912, 0
    %v2915 = vxor.u32 %v2909, 2147483648
    %v2916 = vsel %vm2914, %v2901, %v2915
    %vm2917 = vcmp.eq.s32.totalorder %v2912, 2
    %v2918 = vxor.u32 %v2901, 2147483648
    %v2919 = vsel %vm2917, %v2918, %v2909
    %v2920 = vsel %vm2913, %v2916, %v2919
    %v2921 = vsel %vm2910, nan, %v2920
    %v2922 = vand.u32 2147483647, %v750
    %vm2923 = vcmp.le.f32.partialorder %v2922, 0.7853982
    %vm2924 = vcmp.lt.s32.totalorder %v750, 0
    %v2925 = vand.u32 %v750, 2139095040
    %v2926 = vshrl.u32 %v2925, 23
    %v2927 = vsub.s32 %v2926, 127
    %v2928 = vand.u32 2147483647, %v750
    %v2929 = vand.u32 %v2928, 8388607
    %v2930 = vor.u32 %v2929, 8388608
    %v2931 = vsub.s32 0, %v2930
    %v2932 = vadd.s32 %v2927, 1
    %vm2933 = vcmp.gt.s32.totalorder %v2932, 0
    %v2934 = vsel %vm2933, %v2932, 0
    %v2935 = vshrl.u32 %v2934, 5
    %v2936 = vand.u32 %v2934, 31
    %v2937 = vsub.s32 32, %v2936
    %v2938 = vshrl.u32 683565275, %v2937
    %v2939 = vshll.u32 683565275, %v2936
    %v2940 = vshrl.u32 2475754826, %v2937
    %v2941 = vor.u32 %v2939, %v2940
    %v2942 = vshll.u32 2475754826, %v2936
    %v2943 = vshrl.u32 2131351028, %v2937
    %v2944 = vor.u32 %v2942, %v2943
    %v2945 = vshll.u32 2131351028, %v2936
    %v2946 = vshrl.u32 2102212464, %v2937
    %v2947 = vor.u32 %v2945, %v2946
    %v2948 = vshll.u32 2102212464, %v2936
    %v2949 = vshrl.u32 920167782, %v2937
    %v2950 = vor.u32 %v2948, %v2949
    %v2951 = vshll.u32 920167782, %v2936
    %v2952 = vshrl.u32 1326507024, %v2937
    %v2953 = vor.u32 %v2951, %v2952
    %vm2954 = vcmp.lt.s32.totalorder %v2935, 1
    %vm2955 = vcmp.lt.s32.totalorder %v2935, 2
    %vm2956 = vcmp.lt.s32.totalorder %v2935, 3
    %vm2957 = vcmp.lt.s32.totalorder %v2935, 4
    %v2958 = vsel %vm2954, %v2938, %v2941
    %v2959 = vsel %vm2957, %v2947, 2102212464
    %v2960 = vsel %vm2956, %v2944, %v2959
    %v2961 = vsel %vm2955, %v2958, %v2960
    %v2962 = vsel %vm2954, %v2941, %v2944
    %v2963 = vsel %vm2957, %v2950, 920167782
    %v2964 = vsel %vm2956, %v2947, %v2963
    %v2965 = vsel %vm2955, %v2962, %v2964
    %v2966 = vsel %vm2954, %v2944, %v2947
    %v2967 = vsel %vm2957, %v2953, 1326507024
    %v2968 = vsel %vm2956, %v2950, %v2967
    %v2969 = vsel %vm2955, %v2966, %v2968
    %v2970 = vshll.u32 %v2930, 8
    %v2971 = vand.u32 %v2970, 65535
    %v2972 = vshrl.u32 %v2970, 16
    %v2973 = vand.u32 %v2969, 65535
    %v2974 = vshrl.u32 %v2969, 16
    %v2975 = vmul.u32 %v2971, %v2973
    %v2976 = vmul.u32 %v2971, %v2974
    %v2977 = vmul.u32 %v2972, %v2973
    %v2978 = vmul.u32 %v2972, %v2974
    %v2979 = vshll.u32 %v2976, 16
    %v2980 = vshrl.u32 %v2976, 16
    %v2981 = vshll.u32 %v2977, 16
    %v2982 = vshrl.u32 %v2977, 16
    %vm2983 = vc.u32 %v2975, %v2979
    %v2984 = vsel %vm2983, 1, 0
    %v2985 = vadd.s32 %v2975, %v2979
    %v2986 = vadd.s32 %v2978, %v2984
    %vm2987 = vc.u32 %v2985, %v2981
    %v2988 = vsel %vm2987, 1, 0
    %v2989 = vadd.s32 %v2985, %v2981
    %v2990 = vadd.s32 %v2986, %v2988
    %v2991 = vadd.s32 %v2990, %v2980
    %v2992 = vadd.s32 %v2991, %v2982
    %v2993 = vand.u32 %v2970, 65535
    %v2994 = vshrl.u32 %v2970, 16
    %v2995 = vand.u32 %v2965, 65535
    %v2996 = vshrl.u32 %v2965, 16
    %v2997 = vmul.u32 %v2993, %v2995
    %v2998 = vmul.u32 %v2993, %v2996
    %v2999 = vmul.u32 %v2994, %v2995
    %v3000 = vmul.u32 %v2994, %v2996
    %v3001 = vshll.u32 %v2998, 16
    %v3002 = vshrl.u32 %v2998, 16
    %v3003 = vshll.u32 %v2999, 16
    %v3004 = vshrl.u32 %v2999, 16
    %vm3005 = vc.u32 %v2997, %v3001
    %v3006 = vsel %vm3005, 1, 0
    %v3007 = vadd.s32 %v2997, %v3001
    %v3008 = vadd.s32 %v3000, %v3006
    %vm3009 = vc.u32 %v3007, %v3003
    %v3010 = vsel %vm3009, 1, 0
    %v3011 = vadd.s32 %v3007, %v3003
    %v3012 = vadd.s32 %v3008, %v3010
    %v3013 = vadd.s32 %v3012, %v3002
    %v3014 = vadd.s32 %v3013, %v3004
    %v3015 = vmul.u32 %v2970, %v2961
    %v3016 = vadd.s32 %v2992, %v3011
    %vm3017 = vc.u32 %v2992, %v3011
    %v3018 = vadd.s32 %v3014, 1
    %v3019 = vsel %vm3017, %v3018, %v3014
    %v3020 = vadd.s32 %v3015, %v3019
    %v3021 = vadd.s32 %v3020, 536870912
    %v3022 = vshrl.u32 %v3021, 30
    %v3023 = vshll.u32 %v3022, 30
    %v3024 = vsub.s32 %v3020, %v3023
    %vm3025 = vcmp.lt.s32.totalorder %v3024, 0
    %v3026 = vsub.s32 0, %v3024
    %v3027 = vsel %vm3025, %v3026, %v3024
    %v3028 = vclz %v3027
    %v3029 = vsub.s32 %v3028, 2
    %vm3030 = vcmp.gt.s32.totalorder 0, %v3029
    %v3031 = vsel %vm3030, 0, %v3029
    %v3032 = vsub.s32 32, %v3031
    %v3033 = vshll.u32 %v3024, %v3031
    %v3034 = vshrl.u32 %v3016, %v3032
    %v3035 = vor.u32 %v3033, %v3034
    %v3036 = vsub.s32 4294967266, %v3031
    %v3037 = vadd.s32 %v3036, 127
    %v3038 = vshll.u32 %v3037, 23
    %v3039 = vor.u32 4788187, %v3038
    %v3040 = vand.u32 2147483647, %v3039
    %v3042 = vcvt.s32.f32 %v3035
    %v3043 = vmul.f32 %v3042, %v3040
    %v3044 = vxor.u32 %v3043, 2147483648
    %v3045 = vsel %vm2924, %v3044, %v3043
    %v3046 = vsub.s32 4, %v3022
    %v3047 = vsel %vm2924, %v3046, %v3022
    %v3048 = vsel %vm2923, %v750, %v3045
    %v3049 = vsel %vm2923, 0, %v3047
    %v3050 = vmul.f32 %v3048, %v3048
    %v3051 = vmul.f32 %v3050, -0.001358992
    %v3052 = vadd.f32 %v3051, 0.041655596
    %v3053 = vmul.f32 %v3050, %v3052
    %v3054 = vadd.f32 %v3053, -0.4999988
    %v3055 = vmul.f32 %v3050, %v3054
    %v3056 = vadd.f32 1.0, %v3055
    %v3057 = vmul.f32 %v3048, %v3048
    %v3058 = vmul.f32 %v3057, -0.00019511016
    %v3059 = vadd.f32 %v3058, 0.008332121
    %v3060 = vmul.f32 %v3057, %v3059
    %v3061 = vadd.f32 %v3060, -0.16666654
    %v3062 = vmul.f32 %v3057, %v3061
    %v3063 = vadd.f32 %v3062, 1.0
    %v3064 = vmul.f32 %v3063, %v3048
    %vm3065 = vweird.f32 %v750
    %v3066 = vadd.s32 %v3049, 3
    %v3067 = vand.u32 %v3066, 3
    %vm3068 = vcmp.lt.s32.totalorder %v3067, 2
    %vm3069 = vcmp.eq.s32.totalorder %v3067, 0
    %v3070 = vxor.u32 %v3064, 2147483648
    %v3071 = vsel %vm3069, %v3056, %v3070
    %vm3072 = vcmp.eq.s32.totalorder %v3067, 2
    %v3073 = vxor.u32 %v3056, 2147483648
    %v3074 = vsel %vm3072, %v3073, %v3064
    %v3075 = vsel %vm3068, %v3071, %v3074
    %v3076 = vsel %vm3065, nan, %v3075
    %v3077 = vand.u32 2147483647, %v751
    %vm3078 = vcmp.le.f32.partialorder %v3077, 0.7853982
    %vm3079 = vcmp.lt.s32.totalorder %v751, 0
    %v3080 = vand.u32 %v751, 2139095040
    %v3081 = vshrl.u32 %v3080, 23
    %v3082 = vsub.s32 %v3081, 127
    %v3083 = vand.u32 2147483647, %v751
    %v3084 = vand.u32 %v3083, 8388607
    %v3085 = vor.u32 %v3084, 8388608
    %v3086 = vsub.s32 0, %v3085
    %v3087 = vadd.s32 %v3082, 1
    %vm3088 = vcmp.gt.s32.totalorder %v3087, 0
    %v3089 = vsel %vm3088, %v3087, 0
    %v3090 = vshrl.u32 %v3089, 5
    %v3091 = vand.u32 %v3089, 31
    %v3092 = vsub.s32 32, %v3091
    %v3093 = vshrl.u32 683565275, %v3092
    %v3094 = vshll.u32 683565275, %v3091
    %v3095 = vshrl.u32 2475754826, %v3092
    %v3096 = vor.u32 %v3094, %v3095
    %v3097 = vshll.u32 2475754826, %v3091
    %v3098 = vshrl.u32 2131351028, %v3092
    %v3099 = vor.u32 %v3097, %v3098
    %v3100 = vshll.u32 2131351028, %v3091
    %v3101 = vshrl.u32 2102212464, %v3092
    %v3102 = vor.u32 %v3100, %v3101
    %v3103 = vshll.u32 2102212464, %v3091
    %v3104 = vshrl.u32 920167782, %v3092
    %v3105 = vor.u32 %v3103, %v3104
    %v3106 = vshll.u32 920167782, %v3091
    %v3107 = vshrl.u32 1326507024, %v3092
    %v3108 = vor.u32 %v3106, %v3107
    %vm3109 = vcmp.lt.s32.totalorder %v3090, 1
    %vm3110 = vcmp.lt.s32.totalorder %v3090, 2
    %vm3111 = vcmp.lt.s32.totalorder %v3090, 3
    %vm3112 = vcmp.lt.s32.totalorder %v3090, 4
    %v3113 = vsel %vm3109, %v3093, %v3096
    %v3114 = vsel %vm3112, %v3102, 2102212464
    %v3115 = vsel %vm3111, %v3099, %v3114
    %v3116 = vsel %vm3110, %v3113, %v3115
    %v3117 = vsel %vm3109, %v3096, %v3099
    %v3118 = vsel %vm3112, %v3105, 920167782
    %v3119 = vsel %vm3111, %v3102, %v3118
    %v3120 = vsel %vm3110, %v3117, %v3119
    %v3121 = vsel %vm3109, %v3099, %v3102
    %v3122 = vsel %vm3112, %v3108, 1326507024
    %v3123 = vsel %vm3111, %v3105, %v3122
    %v3124 = vsel %vm3110, %v3121, %v3123
    %v3125 = vshll.u32 %v3085, 8
    %v3126 = vand.u32 %v3125, 65535
    %v3127 = vshrl.u32 %v3125, 16
    %v3128 = vand.u32 %v3124, 65535
    %v3129 = vshrl.u32 %v3124, 16
    %v3130 = vmul.u32 %v3126, %v3128
    %v3131 = vmul.u32 %v3126, %v3129
    %v3132 = vmul.u32 %v3127, %v3128
    %v3133 = vmul.u32 %v3127, %v3129
    %v3134 = vshll.u32 %v3131, 16
    %v3135 = vshrl.u32 %v3131, 16
    %v3136 = vshll.u32 %v3132, 16
    %v3137 = vshrl.u32 %v3132, 16
    %vm3138 = vc.u32 %v3130, %v3134
    %v3139 = vsel %vm3138, 1, 0
    %v3140 = vadd.s32 %v3130, %v3134
    %v3141 = vadd.s32 %v3133, %v3139
    %vm3142 = vc.u32 %v3140, %v3136
    %v3143 = vsel %vm3142, 1, 0
    %v3144 = vadd.s32 %v3140, %v3136
    %v3145 = vadd.s32 %v3141, %v3143
    %v3146 = vadd.s32 %v3145, %v3135
    %v3147 = vadd.s32 %v3146, %v3137
    %v3148 = vand.u32 %v3125, 65535
    %v3149 = vshrl.u32 %v3125, 16
    %v3150 = vand.u32 %v3120, 65535
    %v3151 = vshrl.u32 %v3120, 16
    %v3152 = vmul.u32 %v3148, %v3150
    %v3153 = vmul.u32 %v3148, %v3151
    %v3154 = vmul.u32 %v3149, %v3150
    %v3155 = vmul.u32 %v3149, %v3151
    %v3156 = vshll.u32 %v3153, 16
    %v3157 = vshrl.u32 %v3153, 16
    %v3158 = vshll.u32 %v3154, 16
    %v3159 = vshrl.u32 %v3154, 16
    %vm3160 = vc.u32 %v3152, %v3156
    %v3161 = vsel %vm3160, 1, 0
    %v3162 = vadd.s32 %v3152, %v3156
    %v3163 = vadd.s32 %v3155, %v3161
    %vm3164 = vc.u32 %v3162, %v3158
    %v3165 = vsel %vm3164, 1, 0
    %v3166 = vadd.s32 %v3162, %v3158
    %v3167 = vadd.s32 %v3163, %v3165
    %v3168 = vadd.s32 %v3167, %v3157
    %v3169 = vadd.s32 %v3168, %v3159
    %v3170 = vmul.u32 %v3125, %v3116
    %v3171 = vadd.s32 %v3147, %v3166
    %vm3172 = vc.u32 %v3147, %v3166
    %v3173 = vadd.s32 %v3169, 1
    %v3174 = vsel %vm3172, %v3173, %v3169
    %v3175 = vadd.s32 %v3170, %v3174
    %v3176 = vadd.s32 %v3175, 536870912
    %v3177 = vshrl.u32 %v3176, 30
    %v3178 = vshll.u32 %v3177, 30
    %v3179 = vsub.s32 %v3175, %v3178
    %vm3180 = vcmp.lt.s32.totalorder %v3179, 0
    %v3181 = vsub.s32 0, %v3179
    %v3182 = vsel %vm3180, %v3181, %v3179
    %v3183 = vclz %v3182
    %v3184 = vsub.s32 %v3183, 2
    %vm3185 = vcmp.gt.s32.totalorder 0, %v3184
    %v3186 = vsel %vm3185, 0, %v3184
    %v3187 = vsub.s32 32, %v3186
    %v3188 = vshll.u32 %v3179, %v3186
    %v3189 = vshrl.u32 %v3171, %v3187
    %v3190 = vor.u32 %v3188, %v3189
    %v3191 = vsub.s32 4294967266, %v3186
    %v3192 = vadd.s32 %v3191, 127
    %v3193 = vshll.u32 %v3192, 23
    %v3194 = vor.u32 4788187, %v3193
    %v3195 = vand.u32 2147483647, %v3194
    %v3197 = vcvt.s32.f32 %v3190
    %v3198 = vmul.f32 %v3197, %v3195
    %v3199 = vxor.u32 %v3198, 2147483648
    %v3200 = vsel %vm3079, %v3199, %v3198
    %v3201 = vsub.s32 4, %v3177
    %v3202 = vsel %vm3079, %v3201, %v3177
    %v3203 = vsel %vm3078, %v751, %v3200
    %v3204 = vsel %vm3078, 0, %v3202
    %v3205 = vmul.f32 %v3203, %v3203
    %v3206 = vmul.f32 %v3205, -0.001358992
    %v3207 = vadd.f32 %v3206, 0.041655596
    %v3208 = vmul.f32 %v3205, %v3207
    %v3209 = vadd.f32 %v3208, -0.4999988
    %v3210 = vmul.f32 %v3205, %v3209
    %v3211 = vadd.f32 1.0, %v3210
    %v3212 = vmul.f32 %v3203, %v3203
    %v3213 = vmul.f32 %v3212, -0.00019511016
    %v3214 = vadd.f32 %v3213, 0.008332121
    %v3215 = vmul.f32 %v3212, %v3214
    %v3216 = vadd.f32 %v3215, -0.16666654
    %v3217 = vmul.f32 %v3212, %v3216
    %v3218 = vadd.f32 %v3217, 1.0
    %v3219 = vmul.f32 %v3218, %v3203
    %vm3220 = vweird.f32 %v751
    %v3221 = vadd.s32 %v3204, 3
    %v3222 = vand.u32 %v3221, 3
    %vm3223 = vcmp.lt.s32.totalorder %v3222, 2
    %vm3224 = vcmp.eq.s32.totalorder %v3222, 0
    %v3225 = vxor.u32 %v3219, 2147483648
    %v3226 = vsel %vm3224, %v3211, %v3225
    %vm3227 = vcmp.eq.s32.totalorder %v3222, 2
    %v3228 = vxor.u32 %v3211, 2147483648
    %v3229 = vsel %vm3227, %v3228, %v3219
    %v3230 = vsel %vm3223, %v3226, %v3229
    %v3231 = vsel %vm3220, nan, %v3230
    %3232 = vst [vmem:[#allocation7] sm:$0xff] %v906
    %3233 = vst [vmem:[#allocation7 + $0x8] sm:$0xff] %v1061
    %3234 = vst [vmem:[#allocation7 + $0x10] sm:$0xff] %v1216
    %3235 = vst [vmem:[#allocation7 + $0x18] sm:$0xff] %v1371
    %3236 = vst [vmem:[#allocation7 + $0x20] sm:$0xff] %v1526
    %3237 = vst [vmem:[#allocation7 + $0x28] sm:$0xff] %v1681
    %3238 = vst [vmem:[#allocation7 + $0x30] sm:$0xff] %v1836
    %3239 = vst [vmem:[#allocation7 + $0x38] sm:$0xff] %v1991
    %3240 = vst [vmem:[#allocation7 + $0x40] sm:$0xff] %v2146
    %3241 = vst [vmem:[#allocation7 + $0x48] sm:$0xff] %v2301
    %3242 = vst [vmem:[#allocation7 + $0x50] sm:$0xff] %v2456
    %3243 = vst [vmem:[#allocation7 + $0x58] sm:$0xff] %v2611
    %3244 = vst [vmem:[#allocation7 + $0x60] sm:$0xff] %v2766
    %3245 = vst [vmem:[#allocation7 + $0x68] sm:$0xff] %v2921
    %3246 = vst [vmem:[#allocation7 + $0x70] sm:$0xff] %v3076
    %3247 = vst [vmem:[#allocation7 + $0x78] sm:$0xff] %v3231
    // Predicated region
    $region30: #{tpu_custom_call.1} parent=1 // pred_check
      _
    $region31: #{tpu_custom_call.1} parent=1 // pred_check_branch
      %3249 = sbr.rel (0) target = $region33
    $region32: #{tpu_custom_call.1} parent=1 // pred_region
      %3251 = vsyncadd [#allocation4], 0
      %s3252 = sshll.u32 [#allocation7], 4
      %s3253 = int_to_ptr.vmem [resolvable:$true] %s3252
      %s3254 = sshll.u32 %s5, 4
      %s3255 = int_to_ptr.hbm [resolvable:$true] %s3254
      %3260 = dma.vmem_to_hbm [thread:$0]  %s3253, 2048, %s3255, [#allocation4], 128, 128, 8
    $region33: #{tpu_custom_call.1} parent=1 // pred_fallthru
      _
    // Predicated region
    $region34: #{tpu_custom_call.1} parent=1 // pred_check
      _
    $region35: #{tpu_custom_call.1} parent=1 // pred_check_branch
      %3262 = sbr.rel (0) target = $region37
    $region36: #{tpu_custom_call.1} parent=1 // pred_region
      %3264 = dma.done [#allocation4], 2048
    $region37: #{tpu_custom_call.1} parent=1 // pred_fallthru
      _
    %3265 = vsyncpa [#allocation3], 1
    %3266 = vsyncpa [#allocation6], 1
    %3267 = vsyncpa [#allocation4], 1

</llo_original>
